<compile_context>
chip_gen: v6e
topology: v6e:2x2x1
jax: 0.10.0
libtpu: 0.0.40
codegen_flags: <defaults>
</compile_context>

<pallas_src>
import jax
import jax.numpy as jnp
from jax.experimental import pallas as pl
from jax.experimental.pallas import tpu as pltpu

LANE = 128


def _round_up(n, m):
    return ((n + m - 1) // m) * m


def _pad_to(x, shape):
    pads = [(0, s - d) for d, s in zip(x.shape, shape)]
    if all(p == (0, 0) for p in pads):
        return x
    return jnp.pad(x, pads)


# ----------------------------------------------------------------------------
# Pallas kernel: one grid step == (one batch element, one tile of search pixels).
# ----------------------------------------------------------------------------
def _gat_kernel(xf_ref, zf_ref,
                wq_ref, bq_ref,          # query   (1x1 conv)
                ws_ref, bs_ref,          # support (1x1 conv)
                wg_ref, bg_ref,          # g       (1x1 conv, BN folded)
                wfe_ref, wfg_ref, bfi_ref,   # fi, split into [embedding | xf_g] halves
                out_ref):
    f32, bf16 = jnp.float32, jnp.bfloat16

    xf = xf_ref[0]                       # (Tnx, Cp)  bf16, search pixel tile
    zf = zf_ref[0]                       # (Nz,  Cp)  bf16, template pixels

    # 1x1 convs == per-pixel channel matmuls (bf16 operands, f32 accumulate);
    # bias add / ReLU stay in f32 on the VPU.
    xf_trans = jnp.dot(xf, wq_ref[...], preferred_element_type=f32) + bq_ref[...]
    zf_trans = jnp.dot(zf, ws_ref[...], preferred_element_type=f32) + bs_ref[...]
    xf_g = jnp.maximum(
        jnp.dot(xf, wg_ref[...], preferred_element_type=f32) + bg_ref[...], 0.0)
    zf_g = jnp.maximum(
        jnp.dot(zf, wg_ref[...], preferred_element_type=f32) + bg_ref[...], 0.0)

    # similar[i, j] = <xf_trans[i, :], zf_trans[j, :]>  -> (Tnx, Nz)
    # Contraction on the channel axis of both operands: no explicit .T, so the
    # XLU stays out of the matmul path.
    similar = jax.lax.dot_general(
        xf_trans.astype(bf16), zf_trans.astype(bf16),
        (((1,), (1,)), ((), ())), preferred_element_type=f32)

    # softmax over template pixels (dim=2 in the torch code); reciprocal runs
    # on the EUP slot instead of a VALU divide.
    m = jnp.max(similar, axis=-1, keepdims=True)
    p = jnp.exp(similar - m)
    inv = pl.reciprocal(jnp.sum(p, axis=-1, keepdims=True), approx=True)
    sm = p * inv

    # embedding = softmax(similar) @ zf_g                        -> (Tnx, Cp)
    embedding = jnp.dot(sm.astype(bf16), zf_g.astype(bf16),
                        preferred_element_type=f32)

    # fi branch without the channel concat: two MXU matmuls + a VPU add.
    out = (jnp.dot(embedding.astype(bf16), wfe_ref[...], preferred_element_type=f32)
           + jnp.dot(xf_g.astype(bf16), wfg_ref[...], preferred_element_type=f32)
           + bfi_ref[...])
    out_ref[0] = jnp.maximum(out, 0.0).astype(out_ref.dtype)


# ----------------------------------------------------------------------------
# BN folding (eval mode) into the preceding 1x1 conv.
# ----------------------------------------------------------------------------
def _fold_bn(w, b, gamma, beta, mean, var, eps=1e-5):
    """w: (Cin, Cout), b: (Cout,) -> folded (w, b)."""
    scale = gamma / jnp.sqrt(var + eps)          # (Cout,)
    return w * scale[None, :], b * scale + beta - mean * scale


# ----------------------------------------------------------------------------
# Channel-last flat entry point (preferred integration: no NCHW transposes).
#   zf_flat: (B, Nz, C), xf_flat: (B, Nx, C)  ->  (B, Nx, Cout)
# ----------------------------------------------------------------------------
def graph_attention_union_flat(zf_flat, xf_flat, params):
    B, Nz, C = zf_flat.shape
    _, Nx, _ = xf_flat.shape
    Cout = params["fi_b"].shape[0]

    Cp = _round_up(C, LANE)
    Coutp = _round_up(Cout, LANE)

    # Fold BN into the g and fi convs (parameter glue in plain JAX).
    wg, bg = _fold_bn(params["g_w"], params["g_b"],
                      params["g_gamma"], params["g_beta"],
                      params["g_mean"], params["g_var"])
    wfi, bfi = _fold_bn(params["fi_w"], params["fi_b"],
                        params["fi_gamma"], params["fi_beta"],
                        params["fi_mean"], params["fi_var"])
    # Split fi weight so the kernel needs no channel concat:
    #   torch concat order is [embedding, xf_g] along channels.
    wfe, wfg = wfi[:C], wfi[C:]

    def prep_w(w, rows, cols):           # bf16 matmul operands
        return _pad_to(w, (rows, cols)).astype(jnp.bfloat16)

    def prep_b(b, cols):                 # biases stay f32 (elementwise path)
        return _pad_to(b, (cols,)).reshape(1, cols).astype(jnp.float32)

    # Zero-pad channels to the 128-lane width; padded weight rows/cols are zero
    # so the padded channels contribute nothing and the padded outputs are 0.
    xf_p = _pad_to(xf_flat, (B, Nx, Cp)).astype(jnp.bfloat16)
    zf_p = _pad_to(zf_flat, (B, Nz, Cp)).astype(jnp.bfloat16)

    wq, bq = prep_w(params["q_w"], Cp, Cp), prep_b(params["q_b"], Cp)
    ws, bs = prep_w(params["s_w"], Cp, Cp), prep_b(params["s_b"], Cp)
    wgp, bgp = prep_w(wg, Cp, Cp), prep_b(bg, Cp)
    wfep = prep_w(wfe, Cp, Coutp)
    wfgp = prep_w(wfg, Cp, Coutp)
    bfip = prep_b(bfi, Coutp)

    # Tile the search pixels so there are >= 2*B parallel grid units (keeps the
    # second TensorCore busy on v7x even at small B).
    tnx = LANE if (Nx % LANE == 0 and Nx > LANE) else Nx
    ntx = Nx // tnx

    # NOTE: the weight/bias inputs are grid-invariant, so they would not need
    # double-buffering; left as default specs (tiny arrays, negligible VMEM).
    w_sq = pl.BlockSpec((Cp, Cp), lambda b, t: (0, 0))
    w_fi = pl.BlockSpec((Cp, Coutp), lambda b, t: (0, 0))
    b_c = pl.BlockSpec((1, Cp), lambda b, t: (0, 0))
    b_co = pl.BlockSpec((1, Coutp), lambda b, t: (0, 0))

    out = pl.pallas_call(
        _gat_kernel,
        out_shape=jax.ShapeDtypeStruct((B, Nx, Coutp), jnp.float32),
        grid_spec=pltpu.PrefetchScalarGridSpec(
            num_scalar_prefetch=0,
            grid=(B, ntx),
            in_specs=[
                pl.BlockSpec((1, tnx, Cp), lambda b, t: (b, t, 0)),   # xf tile
                pl.BlockSpec((1, Nz, Cp), lambda b, t: (b, 0, 0)),    # zf (whole)
                w_sq, b_c,                                            # query
                w_sq, b_c,                                            # support
                w_sq, b_c,                                            # g (folded)
                w_fi, w_fi, b_co,                                     # fi (folded, split)
            ],
            out_specs=pl.BlockSpec((1, tnx, Coutp), lambda b, t: (b, t, 0)),
        ),
        compiler_params=pltpu.CompilerParams(
            dimension_semantics=("parallel", "parallel")),
    )(xf_p, zf_p, wq, bq, ws, bs, wgp, bgp, wfep, wfgp, bfip)

    # Lane-dense (B, Nx, Coutp) kernel output; slice the real channels back.
    return out[..., :Cout]


# ----------------------------------------------------------------------------
# NCHW convenience wrapper (for parity with the PyTorch module interface).
# Channel-last callers should use graph_attention_union_flat and skip these
# transposes entirely.
# ----------------------------------------------------------------------------
@jax.jit
def graph_attention_union(zf, xf, params):
    """zf, xf: NCHW float32. Returns NCHW float32 of shape (B, Cout, Hx, Wx)."""
    B, C, Hz, Wz = zf.shape
    _, _, Hx, Wx = xf.shape
    Nz, Nx = Hz * Wz, Hx * Wx

    zf_flat = jnp.transpose(zf.reshape(B, C, Nz), (0, 2, 1))
    xf_flat = jnp.transpose(xf.reshape(B, C, Nx), (0, 2, 1))

    out = graph_attention_union_flat(zf_flat, xf_flat, params)   # (B, Nx, Cout)
    Cout = out.shape[-1]
    return jnp.transpose(out, (0, 2, 1)).reshape(B, Cout, Hx, Wx)


# ----------------------------------------------------------------------------
# Pure-JAX reference (mirrors the PyTorch forward exactly) for verification.
# ----------------------------------------------------------------------------
def _reference(zf, xf, params):
    def conv1x1(x, w, b):
        return jnp.einsum("bchw,cd->bdhw", x, w) + b[None, :, None, None]

    def bn_relu(x, gamma, beta, mean, var, eps=1e-5):
        s = gamma / jnp.sqrt(var + eps)
        y = (x - mean[None, :, None, None]) * s[None, :, None, None] \
            + beta[None, :, None, None]
        return jnp.maximum(y, 0.0)

    xf_trans = conv1x1(xf, params["q_w"], params["q_b"])
    zf_trans = conv1x1(zf, params["s_w"], params["s_b"])
    xf_g = bn_relu(conv1x1(xf, params["g_w"], params["g_b"]),
                   params["g_gamma"], params["g_beta"],
                   params["g_mean"], params["g_var"])
    zf_g = bn_relu(conv1x1(zf, params["g_w"], params["g_b"]),
                   params["g_gamma"], params["g_beta"],
                   params["g_mean"], params["g_var"])

    B, C, Hx, Wx = xf_trans.shape
    _, _, Hz, Wz = zf_trans.shape
    zf_trans_plain = zf_trans.reshape(B, C, Hz * Wz)
    zf_g_plain = jnp.transpose(zf_g.reshape(B, C, Hz * Wz), (0, 2, 1))
    xf_trans_plain = jnp.transpose(xf_trans.reshape(B, C, Hx * Wx), (0, 2, 1))

    similar = jnp.einsum("bnc,bcm->bnm", xf_trans_plain, zf_trans_plain)
    similar = jax.nn.softmax(similar, axis=2)
    embedding = jnp.einsum("bnm,bmc->bnc", similar, zf_g_plain)
    embedding = jnp.transpose(embedding, (0, 2, 1)).reshape(B, C, Hx, Wx)

    output = jnp.concatenate([embedding, xf_g], axis=1)
    output = bn_relu(conv1x1(output, params["fi_w"], params["fi_b"]),
                     params["fi_gamma"], params["fi_beta"],
                     params["fi_mean"], params["fi_var"])
    return output


# ----------------------------------------------------------------------------
def _init_params(key, C, Cout):
    ks = jax.random.split(key, 10)
    scale = 0.05

    def w(k, cin, cout):
        return scale * jax.random.normal(k, (cin, cout), jnp.float32)

    return {
        "q_w": w(ks[0], C, C), "q_b": scale * jax.random.normal(ks[1], (C,)),
        "s_w": w(ks[2], C, C), "s_b": scale * jax.random.normal(ks[3], (C,)),
        "g_w": w(ks[4], C, C), "g_b": scale * jax.random.normal(ks[5], (C,)),
        "g_gamma": 1.0 + 0.1 * jax.random.normal(ks[6], (C,)),
        "g_beta": 0.1 * jax.random.normal(ks[7], (C,)),
        "g_mean": jnp.zeros((C,), jnp.float32),
        "g_var": jnp.ones((C,), jnp.float32),
        "fi_w": w(ks[8], 2 * C, Cout),
        "fi_b": scale * jax.random.normal(ks[9], (Cout,)),
        "fi_gamma": jnp.ones((Cout,), jnp.float32),
        "fi_beta": jnp.zeros((Cout,), jnp.float32),
        "fi_mean": jnp.zeros((Cout,), jnp.float32),
        "fi_var": jnp.ones((Cout,), jnp.float32),
    }


if __name__ == "__main__":
    key = jax.random.PRNGKey(0)
    k_zf, k_xf, k_params = jax.random.split(key, 3)

    # Small shapes consistent with the module: zf = template feature map,
    # xf = search feature map, same channel count, different spatial size.
    B, C, Cout = 2, 32, 32
    Hz = Wz = 8          # template spatial
    Hx = Wx = 16         # search spatial

    zf = jax.random.normal(k_zf, (B, C, Hz, Wz), jnp.float32)
    xf = jax.random.normal(k_xf, (B, C, Hx, Wx), jnp.float32)
    params = _init_params(k_params, C, Cout)

    out = graph_attention_union(zf, xf, params)
    out = jax.block_until_ready(out)

    ref = jax.block_until_ready(_reference(zf, xf, params))
    assert out.shape == (B, Cout, Hx, Wx), out.shape
    # bf16 matmul operands (f32 accumulation) -> relaxed tolerance.
    assert jnp.allclose(out, ref, atol=2e-2, rtol=2e-2), \
        float(jnp.max(jnp.abs(out - ref)))

    print("KERNEL_OK")
</pallas_src>

<mosaic_0001>
module attributes {stable_mosaic.version = 11 : i64} {
  func.func @_gat_kernel(%arg0: i32, %arg1: i32, %arg2: memref<1x128x128xbf16, #tpu.memory_space<vmem>>, %arg3: memref<1x64x128xbf16, #tpu.memory_space<vmem>>, %arg4: memref<128x128xbf16, #tpu.memory_space<vmem>>, %arg5: memref<1x128xf32, #tpu.memory_space<vmem>>, %arg6: memref<128x128xbf16, #tpu.memory_space<vmem>>, %arg7: memref<1x128xf32, #tpu.memory_space<vmem>>, %arg8: memref<128x128xbf16, #tpu.memory_space<vmem>>, %arg9: memref<1x128xf32, #tpu.memory_space<vmem>>, %arg10: memref<128x128xbf16, #tpu.memory_space<vmem>>, %arg11: memref<128x128xbf16, #tpu.memory_space<vmem>>, %arg12: memref<1x128xf32, #tpu.memory_space<vmem>>, %arg13: memref<1x128x128xf32, #tpu.memory_space<vmem>>) attributes {dimension_semantics = [#tpu.dimension_semantics<parallel>, #tpu.dimension_semantics<parallel>], iteration_bounds = array<i64: 2, 2>, scalar_prefetch = 0 : i64, scratch_operands = 0 : i64, tpu.core_type = #tpu.core_type<tc>, window_params = [{transform_indices = @transform_0, window_bounds = array<i64: 1, 128, 128>}, {transform_indices = @transform_1, window_bounds = array<i64: 1, 64, 128>}, {pipeline_mode = #tpu.pipeline_mode<synchronous>, transform_indices = @transform_2, window_bounds = array<i64: 128, 128>}, {pipeline_mode = #tpu.pipeline_mode<synchronous>, transform_indices = @transform_3, window_bounds = array<i64: 1, 128>}, {pipeline_mode = #tpu.pipeline_mode<synchronous>, transform_indices = @transform_4, window_bounds = array<i64: 128, 128>}, {pipeline_mode = #tpu.pipeline_mode<synchronous>, transform_indices = @transform_5, window_bounds = array<i64: 1, 128>}, {pipeline_mode = #tpu.pipeline_mode<synchronous>, transform_indices = @transform_6, window_bounds = array<i64: 128, 128>}, {pipeline_mode = #tpu.pipeline_mode<synchronous>, transform_indices = @transform_7, window_bounds = array<i64: 1, 128>}, {pipeline_mode = #tpu.pipeline_mode<synchronous>, transform_indices = @transform_8, window_bounds = array<i64: 128, 128>}, {pipeline_mode = #tpu.pipeline_mode<synchronous>, transform_indices = @transform_9, window_bounds = array<i64: 128, 128>}, {pipeline_mode = #tpu.pipeline_mode<synchronous>, transform_indices = @transform_10, window_bounds = array<i64: 1, 128>}, {transform_indices = @transform_11, window_bounds = array<i64: 1, 128, 128>}]} {
    %c0 = arith.constant 0 : index
    %c0_0 = arith.constant 0 : index
    %c0_1 = arith.constant 0 : index
    %0 = vector.load %arg2[%c0, %c0_0, %c0_1] : memref<1x128x128xbf16, #tpu.memory_space<vmem>>, vector<1x128x128xbf16>
    %1 = vector.shape_cast %0 : vector<1x128x128xbf16> to vector<128x128xbf16>
    %c0_2 = arith.constant 0 : index
    %c0_3 = arith.constant 0 : index
    %c0_4 = arith.constant 0 : index
    %2 = vector.load %arg3[%c0_2, %c0_3, %c0_4] : memref<1x64x128xbf16, #tpu.memory_space<vmem>>, vector<1x64x128xbf16>
    %3 = vector.shape_cast %2 : vector<1x64x128xbf16> to vector<64x128xbf16>
    %c0_5 = arith.constant 0 : index
    %c0_6 = arith.constant 0 : index
    %4 = vector.load %arg4[%c0_5, %c0_6] : memref<128x128xbf16, #tpu.memory_space<vmem>>, vector<128x128xbf16>
    %cst = arith.constant dense<0.000000e+00> : vector<128x128xf32>
    %5 = tpu.matmul %1, %4, %cst {dimension_numbers = #tpu.dot_dimension_numbers<[1], [0], [0], [1], [0, 0, 1, 1], [], []>} : vector<128x128xbf16>, vector<128x128xbf16>, vector<128x128xf32> -> vector<128x128xf32>
    %c0_7 = arith.constant 0 : index
    %c0_8 = arith.constant 0 : index
    %6 = vector.load %arg5[%c0_7, %c0_8] : memref<1x128xf32, #tpu.memory_space<vmem>>, vector<1x128xf32>
    %7 = vector.broadcast %6 : vector<1x128xf32> to vector<128x128xf32>
    %8 = arith.addf %5, %7 : vector<128x128xf32>
    %c0_9 = arith.constant 0 : index
    %c0_10 = arith.constant 0 : index
    %9 = vector.load %arg6[%c0_9, %c0_10] : memref<128x128xbf16, #tpu.memory_space<vmem>>, vector<128x128xbf16>
    %cst_11 = arith.constant dense<0.000000e+00> : vector<64x128xf32>
    %10 = tpu.matmul %3, %9, %cst_11 {dimension_numbers = #tpu.dot_dimension_numbers<[1], [0], [0], [1], [0, 0, 1, 1], [], []>} : vector<64x128xbf16>, vector<128x128xbf16>, vector<64x128xf32> -> vector<64x128xf32>
    %c0_12 = arith.constant 0 : index
    %c0_13 = arith.constant 0 : index
    %11 = vector.load %arg7[%c0_12, %c0_13] : memref<1x128xf32, #tpu.memory_space<vmem>>, vector<1x128xf32>
    %12 = vector.broadcast %11 : vector<1x128xf32> to vector<64x128xf32>
    %13 = arith.addf %10, %12 : vector<64x128xf32>
    %c0_14 = arith.constant 0 : index
    %c0_15 = arith.constant 0 : index
    %14 = vector.load %arg8[%c0_14, %c0_15] : memref<128x128xbf16, #tpu.memory_space<vmem>>, vector<128x128xbf16>
    %cst_16 = arith.constant dense<0.000000e+00> : vector<128x128xf32>
    %15 = tpu.matmul %1, %14, %cst_16 {dimension_numbers = #tpu.dot_dimension_numbers<[1], [0], [0], [1], [0, 0, 1, 1], [], []>} : vector<128x128xbf16>, vector<128x128xbf16>, vector<128x128xf32> -> vector<128x128xf32>
    %c0_17 = arith.constant 0 : index
    %c0_18 = arith.constant 0 : index
    %16 = vector.load %arg9[%c0_17, %c0_18] : memref<1x128xf32, #tpu.memory_space<vmem>>, vector<1x128xf32>
    %17 = vector.broadcast %16 : vector<1x128xf32> to vector<128x128xf32>
    %18 = arith.addf %15, %17 : vector<128x128xf32>
    %cst_19 = arith.constant 0.000000e+00 : f32
    %19 = vector.broadcast %cst_19 : f32 to vector<128x128xf32>
    %20 = arith.maximumf %18, %19 : vector<128x128xf32>
    %c0_20 = arith.constant 0 : index
    %c0_21 = arith.constant 0 : index
    %21 = vector.load %arg8[%c0_20, %c0_21] : memref<128x128xbf16, #tpu.memory_space<vmem>>, vector<128x128xbf16>
    %cst_22 = arith.constant dense<0.000000e+00> : vector<64x128xf32>
    %22 = tpu.matmul %3, %21, %cst_22 {dimension_numbers = #tpu.dot_dimension_numbers<[1], [0], [0], [1], [0, 0, 1, 1], [], []>} : vector<64x128xbf16>, vector<128x128xbf16>, vector<64x128xf32> -> vector<64x128xf32>
    %c0_23 = arith.constant 0 : index
    %c0_24 = arith.constant 0 : index
    %23 = vector.load %arg9[%c0_23, %c0_24] : memref<1x128xf32, #tpu.memory_space<vmem>>, vector<1x128xf32>
    %24 = vector.broadcast %23 : vector<1x128xf32> to vector<64x128xf32>
    %25 = arith.addf %22, %24 : vector<64x128xf32>
    %cst_25 = arith.constant 0.000000e+00 : f32
    %26 = vector.broadcast %cst_25 : f32 to vector<64x128xf32>
    %27 = arith.maximumf %25, %26 : vector<64x128xf32>
    %28 = arith.truncf %8 : vector<128x128xf32> to vector<128x128xbf16>
    %29 = arith.truncf %13 : vector<64x128xf32> to vector<64x128xbf16>
    %cst_26 = arith.constant dense<0.000000e+00> : vector<128x64xf32>
    %30 = tpu.matmul %28, %29, %cst_26 {dimension_numbers = #tpu.dot_dimension_numbers<[1], [1], [0], [0], [0, 0, 1, 0], [], []>} : vector<128x128xbf16>, vector<64x128xbf16>, vector<128x64xf32> -> vector<128x64xf32>
    %cst_27 = arith.constant dense<0xFF800000> : vector<128xf32>
    %31 = vector.multi_reduction <maximumf>, %30, %cst_27 [1] : vector<128x64xf32> to vector<128xf32>
    %32 = vector.shape_cast %31 : vector<128xf32> to vector<128x1xf32>
    %33 = vector.broadcast %32 : vector<128x1xf32> to vector<128x64xf32>
    %34 = arith.subf %30, %33 : vector<128x64xf32>
    %35 = math.exp %34 : vector<128x64xf32>
    %cst_28 = arith.constant dense<0.000000e+00> : vector<128xf32>
    %36 = vector.multi_reduction <add>, %35, %cst_28 [1] : vector<128x64xf32> to vector<128xf32>
    %37 = vector.shape_cast %36 : vector<128xf32> to vector<128x1xf32>
    %38 = tpu.reciprocal %37 {approx = true} : vector<128x1xf32> -> vector<128x1xf32>
    %39 = vector.broadcast %38 : vector<128x1xf32> to vector<128x64xf32>
    %40 = arith.mulf %35, %39 : vector<128x64xf32>
    %41 = arith.truncf %40 : vector<128x64xf32> to vector<128x64xbf16>
    %42 = arith.truncf %27 : vector<64x128xf32> to vector<64x128xbf16>
    %cst_29 = arith.constant dense<0.000000e+00> : vector<128x128xf32>
    %43 = tpu.matmul %41, %42, %cst_29 {dimension_numbers = #tpu.dot_dimension_numbers<[1], [0], [0], [1], [0, 0, 1, 1], [], []>} : vector<128x64xbf16>, vector<64x128xbf16>, vector<128x128xf32> -> vector<128x128xf32>
    %44 = arith.truncf %43 : vector<128x128xf32> to vector<128x128xbf16>
    %c0_30 = arith.constant 0 : index
    %c0_31 = arith.constant 0 : index
    %45 = vector.load %arg10[%c0_30, %c0_31] : memref<128x128xbf16, #tpu.memory_space<vmem>>, vector<128x128xbf16>
    %cst_32 = arith.constant dense<0.000000e+00> : vector<128x128xf32>
    %46 = tpu.matmul %44, %45, %cst_32 {dimension_numbers = #tpu.dot_dimension_numbers<[1], [0], [0], [1], [0, 0, 1, 1], [], []>} : vector<128x128xbf16>, vector<128x128xbf16>, vector<128x128xf32> -> vector<128x128xf32>
    %47 = arith.truncf %20 : vector<128x128xf32> to vector<128x128xbf16>
    %c0_33 = arith.constant 0 : index
    %c0_34 = arith.constant 0 : index
    %48 = vector.load %arg11[%c0_33, %c0_34] : memref<128x128xbf16, #tpu.memory_space<vmem>>, vector<128x128xbf16>
    %cst_35 = arith.constant dense<0.000000e+00> : vector<128x128xf32>
    %49 = tpu.matmul %47, %48, %cst_35 {dimension_numbers = #tpu.dot_dimension_numbers<[1], [0], [0], [1], [0, 0, 1, 1], [], []>} : vector<128x128xbf16>, vector<128x128xbf16>, vector<128x128xf32> -> vector<128x128xf32>
    %50 = arith.addf %46, %49 : vector<128x128xf32>
    %c0_36 = arith.constant 0 : index
    %c0_37 = arith.constant 0 : index
    %51 = vector.load %arg12[%c0_36, %c0_37] : memref<1x128xf32, #tpu.memory_space<vmem>>, vector<1x128xf32>
    %52 = vector.broadcast %51 : vector<1x128xf32> to vector<128x128xf32>
    %53 = arith.addf %50, %52 : vector<128x128xf32>
    %cst_38 = arith.constant 0.000000e+00 : f32
    %54 = vector.broadcast %cst_38 : f32 to vector<128x128xf32>
    %55 = arith.maximumf %53, %54 : vector<128x128xf32>
    %c0_39 = arith.constant 0 : index
    %c0_40 = arith.constant 0 : index
    %c0_41 = arith.constant 0 : index
    %56 = vector.load %arg13[%c0_39, %c0_40, %c0_41] : memref<1x128x128xf32, #tpu.memory_space<vmem>>, vector<1x128x128xf32>
    %57 = vector.shape_cast %56 : vector<1x128x128xf32> to vector<128x128xf32>
    %58 = vector.shape_cast %55 : vector<128x128xf32> to vector<1x128x128xf32>
    tpu.vector_store %arg13[%c0_39, %c0_40, %c0_41], %58 {strides = array<i32>} : memref<1x128x128xf32, #tpu.memory_space<vmem>>, vector<1x128x128xf32>,
    return
  }
  func.func @transform_0(%arg0: i32, %arg1: i32) -> (i32, i32, i32) {
    %c0_i32 = arith.constant 0 : i32
    %c0_i32_0 = arith.constant 0 : i32
    return %arg0, %arg1, %c0_i32 : i32, i32, i32
  }
  func.func @transform_1(%arg0: i32, %arg1: i32) -> (i32, i32, i32) {
    %c0_i32 = arith.constant 0 : i32
    %c0_i32_0 = arith.constant 0 : i32
    %c0_i32_1 = arith.constant 0 : i32
    return %arg0, %c0_i32, %c0_i32_0 : i32, i32, i32
  }
  func.func @transform_2(%arg0: i32, %arg1: i32) -> (i32, i32) {
    %c0_i32 = arith.constant 0 : i32
    %c0_i32_0 = arith.constant 0 : i32
    %c0_i32_1 = arith.constant 0 : i32
    return %c0_i32, %c0_i32_0 : i32, i32
  }
  func.func @transform_3(%arg0: i32, %arg1: i32) -> (i32, i32) {
    %c0_i32 = arith.constant 0 : i32
    %c0_i32_0 = arith.constant 0 : i32
    %c0_i32_1 = arith.constant 0 : i32
    return %c0_i32, %c0_i32_0 : i32, i32
  }
  func.func @transform_4(%arg0: i32, %arg1: i32) -> (i32, i32) {
    %c0_i32 = arith.constant 0 : i32
    %c0_i32_0 = arith.constant 0 : i32
    %c0_i32_1 = arith.constant 0 : i32
    return %c0_i32, %c0_i32_0 : i32, i32
  }
  func.func @transform_5(%arg0: i32, %arg1: i32) -> (i32, i32) {
    %c0_i32 = arith.constant 0 : i32
    %c0_i32_0 = arith.constant 0 : i32
    %c0_i32_1 = arith.constant 0 : i32
    return %c0_i32, %c0_i32_0 : i32, i32
  }
  func.func @transform_6(%arg0: i32, %arg1: i32) -> (i32, i32) {
    %c0_i32 = arith.constant 0 : i32
    %c0_i32_0 = arith.constant 0 : i32
    %c0_i32_1 = arith.constant 0 : i32
    return %c0_i32, %c0_i32_0 : i32, i32
  }
  func.func @transform_7(%arg0: i32, %arg1: i32) -> (i32, i32) {
    %c0_i32 = arith.constant 0 : i32
    %c0_i32_0 = arith.constant 0 : i32
    %c0_i32_1 = arith.constant 0 : i32
    return %c0_i32, %c0_i32_0 : i32, i32
  }
  func.func @transform_8(%arg0: i32, %arg1: i32) -> (i32, i32) {
    %c0_i32 = arith.constant 0 : i32
    %c0_i32_0 = arith.constant 0 : i32
    %c0_i32_1 = arith.constant 0 : i32
    return %c0_i32, %c0_i32_0 : i32, i32
  }
  func.func @transform_9(%arg0: i32, %arg1: i32) -> (i32, i32) {
    %c0_i32 = arith.constant 0 : i32
    %c0_i32_0 = arith.constant 0 : i32
    %c0_i32_1 = arith.constant 0 : i32
    return %c0_i32, %c0_i32_0 : i32, i32
  }
  func.func @transform_10(%arg0: i32, %arg1: i32) -> (i32, i32) {
    %c0_i32 = arith.constant 0 : i32
    %c0_i32_0 = arith.constant 0 : i32
    %c0_i32_1 = arith.constant 0 : i32
    return %c0_i32, %c0_i32_0 : i32, i32
  }
  func.func @transform_11(%arg0: i32, %arg1: i32) -> (i32, i32, i32) {
    %c0_i32 = arith.constant 0 : i32
    %c0_i32_0 = arith.constant 0 : i32
    return %arg0, %arg1, %c0_i32 : i32, i32, i32
  }
}

</mosaic_0001>

<llo_original>
// kernel: graph_attention_union.1
$region0: #{graph_attention_union.1}
  #allocation0 [shape = 'u32[]', space=smem, size = 0x4, offset = 0x4, fixed_abs, tag = 'smem constant byte address 0x4 - core index']
  #allocation1 [shape = 'u32[144,128]{1,0:T(1,128)}', space=vmem, size = 0x12000, scoped, tag = 'internal scratch']
  %s0 = inlined_call_operand.vmem [shape: bf16[2,256,128], index: 0, kind: input, shape index: {}]
  %s1 = inlined_call_operand.vmem [shape: bf16[2,64,128], index: 1, kind: input, shape index: {}]
  %s2 = inlined_call_operand.vmem [shape: bf16[128,128], index: 2, kind: input, shape index: {}]
  %s3 = inlined_call_operand.vmem [shape: f32[1,128], index: 3, kind: input, shape index: {}]
  %s4 = inlined_call_operand.vmem [shape: bf16[128,128], index: 4, kind: input, shape index: {}]
  %s5 = inlined_call_operand.vmem [shape: f32[1,128], index: 5, kind: input, shape index: {}]
  %s6 = inlined_call_operand.vmem [shape: bf16[128,128], index: 6, kind: input, shape index: {}]
  %s7 = inlined_call_operand.vmem [shape: f32[1,128], index: 7, kind: input, shape index: {}]
  %s8 = inlined_call_operand.vmem [shape: bf16[128,128], index: 8, kind: input, shape index: {}]
  %s9 = inlined_call_operand.vmem [shape: bf16[128,128], index: 9, kind: input, shape index: {}]
  %s10 = inlined_call_operand.vmem [shape: f32[1,128], index: 10, kind: input, shape index: {}]
  %s11 = inlined_call_operand.hbm [shape: f32[2,256,128], index: 11, kind: output, shape index: {}]
  %s12 = sld [smem:[#allocation0]]
  $region77: #{graph_attention_union.1} parent=0
    _
  %s14 = ssub.s32 1, %s12
  %s15 = scalar_select 0, %s14, %s12
  $region1: #{graph_attention_union.1} parent=0
    #allocation2 [shape = 'u8[131072]{0}', space=vmem, size = 0x20000, scoped, tag = 'output window, operand 0']
    #allocation3 [shape = 's32[2]{0}', space=sflag, size = 0x8, scoped, tag = 'scoped memory for graph_attention_union.1']
    %16 = vsyncpa [#allocation3], 0
    %s17 = scalar_lea.sflag [#allocation3], 1
    %18 = vsyncpa %s17, 0
    loop: start=0, step=1, limit=6
    $region2: #{graph_attention_union.1} parent=1 // loop_pre_header
      _
    $region3: #{graph_attention_union.1} parent=1 // loop_header
      %s20 = sphi 0, %s24
      %p21 = scmp.ge.s32.totalorder %s20, 6
      %s27 = sphi 0, %s39
      %s28 = sphi 0, %s35
      %s29 = sphi 0, %s27
      %s30 = sphi 0, %s28
      %s31 = sphi 0, %s29
      %s32 = sphi 0, %s30
      %s44 = sphi 0, %s46
      %s47 = sphi 0, %s44
      %s48 = sphi 0, %s47
      %s64 = sphi 0, %s48
      %s70 = sphi 0, %s72
      %s73 = sphi 0, %s70
      %s74 = sphi 0, %s73
      %s90 = sphi 0, %s74
      %s94 = sphi 0, %s94
      %s96 = sphi 0, %s94
      %s97 = sphi 0, %s96
      %s111 = sphi 0, %s97
      %s115 = sphi 0, %s115
      %s117 = sphi 0, %s115
      %s118 = sphi 0, %s117
      %s132 = sphi 0, %s118
      %s136 = sphi 0, %s136
      %s138 = sphi 0, %s136
      %s139 = sphi 0, %s138
      %s153 = sphi 0, %s139
      %s157 = sphi 0, %s157
      %s159 = sphi 0, %s157
      %s160 = sphi 0, %s159
      %s174 = sphi 0, %s160
      %s178 = sphi 0, %s178
      %s180 = sphi 0, %s178
      %s181 = sphi 0, %s180
      %s195 = sphi 0, %s181
      %s199 = sphi 0, %s199
      %s201 = sphi 0, %s199
      %s202 = sphi 0, %s201
      %s216 = sphi 0, %s202
      %s220 = sphi 0, %s220
      %s222 = sphi 0, %s220
      %s223 = sphi 0, %s222
      %s237 = sphi 0, %s223
      %s241 = sphi 0, %s241
      %s243 = sphi 0, %s241
      %s244 = sphi 0, %s243
      %s258 = sphi 0, %s244
      %s262 = sphi 0, %s262
      %s264 = sphi 0, %s262
      %s265 = sphi 0, %s264
      %s279 = sphi 0, %s265
      %s287 = sphi 0, %s289
      %s290 = sphi 0, %s287
      %s291 = sphi 0, %s290
      %s307 = sphi 0, %s291
    $region4: #{graph_attention_union.1} parent=1 // loop_header_branch
      %23 = sbr.rel (%p21) target = $region8
    $region5: #{graph_attention_union.1} parent=1 // loop_body
      %s25 = ssub.s32 %s20, 1
      %s26 = ssub.s32 %s20, 2
      %s33 = sadd.s32 1, %s28
      %p34 = scmp.ge.s32.totalorder %s33, 2
      %s35 = scalar_select %p34, 0, %s33
      %s36 = sadd.s32 1, %s27
      %s37 = scalar_select %p34, %s36, %s27
      %p38 = scmp.ge.s32.totalorder %s37, 2
      %s39 = scalar_select %p38, 0, %s37
      %s40 = ssub.s32 %s27, %s39
      %s41 = ssub.s32 %s28, %s35
      %s42 = sor.u32 %s40, %s41
      %p43 = scmp.eq.s32.totalorder %s42, 0
      %s45 = sadd.s32 %s44, 1
      %s46 = scalar_select %p43, %s44, %s45
      %p49 = pneg %p43
      %p50 = scmp.eq.s32.totalorder %s20, 3
      %p51 = por %p49, %p50
      %p52 = scmp.ne.s32.totalorder %s44, %s47
      %p53 = scmp.eq.s32.totalorder %s20, 0
      %p54 = por %p52, %p53
      %p55 = scmp.ne.s32.totalorder %s44, %s47
      %p56 = scmp.eq.s32.totalorder %s25, 3
      %p57 = por %p55, %p56
      %p58 = scmp.ne.s32.totalorder %s47, %s48
      %p59 = scmp.eq.s32.totalorder %s25, 0
      %p60 = por %p58, %p59
      %p61 = scmp.ne.s32.totalorder %s47, %s48
      %p62 = scmp.eq.s32.totalorder %s26, 3
      %p63 = por %p61, %p62
      %p65 = scmp.ne.s32.totalorder %s48, %s64
      %p66 = scmp.eq.s32.totalorder %s26, 0
      %p67 = por %p65, %p66
      %s68 = ssub.s32 %s27, %s39
      %p69 = scmp.eq.s32.totalorder %s68, 0
      %s71 = sadd.s32 %s70, 1
      %s72 = scalar_select %p69, %s70, %s71
      %p75 = pneg %p69
      %p76 = scmp.eq.s32.totalorder %s20, 3
      %p77 = por %p75, %p76
      %p78 = scmp.ne.s32.totalorder %s70, %s73
      %p79 = scmp.eq.s32.totalorder %s20, 0
      %p80 = por %p78, %p79
      %p81 = scmp.ne.s32.totalorder %s70, %s73
      %p82 = scmp.eq.s32.totalorder %s25, 3
      %p83 = por %p81, %p82
      %p84 = scmp.ne.s32.totalorder %s73, %s74
      %p85 = scmp.eq.s32.totalorder %s25, 0
      %p86 = por %p84, %p85
      %p87 = scmp.ne.s32.totalorder %s73, %s74
      %p88 = scmp.eq.s32.totalorder %s26, 3
      %p89 = por %p87, %p88
      %p91 = scmp.ne.s32.totalorder %s74, %s90
      %p92 = scmp.eq.s32.totalorder %s26, 0
      %p93 = por %p91, %p92
      %s95 = sadd.s32 %s94, 1
      %p98 = scmp.eq.s32.totalorder %s20, 3
      %p99 = scmp.ne.s32.totalorder %s94, %s96
      %p100 = scmp.eq.s32.totalorder %s20, 0
      %p101 = por %p99, %p100
      %p102 = scmp.ne.s32.totalorder %s94, %s96
      %p103 = scmp.eq.s32.totalorder %s25, 3
      %p104 = por %p102, %p103
      %p105 = scmp.ne.s32.totalorder %s96, %s97
      %p106 = scmp.eq.s32.totalorder %s25, 0
      %p107 = por %p105, %p106
      %p108 = scmp.ne.s32.totalorder %s96, %s97
      %p109 = scmp.eq.s32.totalorder %s26, 3
      %p110 = por %p108, %p109
      %p112 = scmp.ne.s32.totalorder %s97, %s111
      %p113 = scmp.eq.s32.totalorder %s26, 0
      %p114 = por %p112, %p113
      %s116 = sadd.s32 %s115, 1
      %p119 = scmp.eq.s32.totalorder %s20, 3
      %p120 = scmp.ne.s32.totalorder %s115, %s117
      %p121 = scmp.eq.s32.totalorder %s20, 0
      %p122 = por %p120, %p121
      %p123 = scmp.ne.s32.totalorder %s115, %s117
      %p124 = scmp.eq.s32.totalorder %s25, 3
      %p125 = por %p123, %p124
      %p126 = scmp.ne.s32.totalorder %s117, %s118
      %p127 = scmp.eq.s32.totalorder %s25, 0
      %p128 = por %p126, %p127
      %p129 = scmp.ne.s32.totalorder %s117, %s118
      %p130 = scmp.eq.s32.totalorder %s26, 3
      %p131 = por %p129, %p130
      %p133 = scmp.ne.s32.totalorder %s118, %s132
      %p134 = scmp.eq.s32.totalorder %s26, 0
      %p135 = por %p133, %p134
      %s137 = sadd.s32 %s136, 1
      %p140 = scmp.eq.s32.totalorder %s20, 3
      %p141 = scmp.ne.s32.totalorder %s136, %s138
      %p142 = scmp.eq.s32.totalorder %s20, 0
      %p143 = por %p141, %p142
      %p144 = scmp.ne.s32.totalorder %s136, %s138
      %p145 = scmp.eq.s32.totalorder %s25, 3
      %p146 = por %p144, %p145
      %p147 = scmp.ne.s32.totalorder %s138, %s139
      %p148 = scmp.eq.s32.totalorder %s25, 0
      %p149 = por %p147, %p148
      %p150 = scmp.ne.s32.totalorder %s138, %s139
      %p151 = scmp.eq.s32.totalorder %s26, 3
      %p152 = por %p150, %p151
      %p154 = scmp.ne.s32.totalorder %s139, %s153
      %p155 = scmp.eq.s32.totalorder %s26, 0
      %p156 = por %p154, %p155
      %s158 = sadd.s32 %s157, 1
      %p161 = scmp.eq.s32.totalorder %s20, 3
      %p162 = scmp.ne.s32.totalorder %s157, %s159
      %p163 = scmp.eq.s32.totalorder %s20, 0
      %p164 = por %p162, %p163
      %p165 = scmp.ne.s32.totalorder %s157, %s159
      %p166 = scmp.eq.s32.totalorder %s25, 3
      %p167 = por %p165, %p166
      %p168 = scmp.ne.s32.totalorder %s159, %s160
      %p169 = scmp.eq.s32.totalorder %s25, 0
      %p170 = por %p168, %p169
      %p171 = scmp.ne.s32.totalorder %s159, %s160
      %p172 = scmp.eq.s32.totalorder %s26, 3
      %p173 = por %p171, %p172
      %p175 = scmp.ne.s32.totalorder %s160, %s174
      %p176 = scmp.eq.s32.totalorder %s26, 0
      %p177 = por %p175, %p176
      %s179 = sadd.s32 %s178, 1
      %p182 = scmp.eq.s32.totalorder %s20, 3
      %p183 = scmp.ne.s32.totalorder %s178, %s180
      %p184 = scmp.eq.s32.totalorder %s20, 0
      %p185 = por %p183, %p184
      %p186 = scmp.ne.s32.totalorder %s178, %s180
      %p187 = scmp.eq.s32.totalorder %s25, 3
      %p188 = por %p186, %p187
      %p189 = scmp.ne.s32.totalorder %s180, %s181
      %p190 = scmp.eq.s32.totalorder %s25, 0
      %p191 = por %p189, %p190
      %p192 = scmp.ne.s32.totalorder %s180, %s181
      %p193 = scmp.eq.s32.totalorder %s26, 3
      %p194 = por %p192, %p193
      %p196 = scmp.ne.s32.totalorder %s181, %s195
      %p197 = scmp.eq.s32.totalorder %s26, 0
      %p198 = por %p196, %p197
      %s200 = sadd.s32 %s199, 1
      %p203 = scmp.eq.s32.totalorder %s20, 3
      %p204 = scmp.ne.s32.totalorder %s199, %s201
      %p205 = scmp.eq.s32.totalorder %s20, 0
      %p206 = por %p204, %p205
      %p207 = scmp.ne.s32.totalorder %s199, %s201
      %p208 = scmp.eq.s32.totalorder %s25, 3
      %p209 = por %p207, %p208
      %p210 = scmp.ne.s32.totalorder %s201, %s202
      %p211 = scmp.eq.s32.totalorder %s25, 0
      %p212 = por %p210, %p211
      %p213 = scmp.ne.s32.totalorder %s201, %s202
      %p214 = scmp.eq.s32.totalorder %s26, 3
      %p215 = por %p213, %p214
      %p217 = scmp.ne.s32.totalorder %s202, %s216
      %p218 = scmp.eq.s32.totalorder %s26, 0
      %p219 = por %p217, %p218
      %s221 = sadd.s32 %s220, 1
      %p224 = scmp.eq.s32.totalorder %s20, 3
      %p225 = scmp.ne.s32.totalorder %s220, %s222
      %p226 = scmp.eq.s32.totalorder %s20, 0
      %p227 = por %p225, %p226
      %p228 = scmp.ne.s32.totalorder %s220, %s222
      %p229 = scmp.eq.s32.totalorder %s25, 3
      %p230 = por %p228, %p229
      %p231 = scmp.ne.s32.totalorder %s222, %s223
      %p232 = scmp.eq.s32.totalorder %s25, 0
      %p233 = por %p231, %p232
      %p234 = scmp.ne.s32.totalorder %s222, %s223
      %p235 = scmp.eq.s32.totalorder %s26, 3
      %p236 = por %p234, %p235
      %p238 = scmp.ne.s32.totalorder %s223, %s237
      %p239 = scmp.eq.s32.totalorder %s26, 0
      %p240 = por %p238, %p239
      %s242 = sadd.s32 %s241, 1
      %p245 = scmp.eq.s32.totalorder %s20, 3
      %p246 = scmp.ne.s32.totalorder %s241, %s243
      %p247 = scmp.eq.s32.totalorder %s20, 0
      %p248 = por %p246, %p247
      %p249 = scmp.ne.s32.totalorder %s241, %s243
      %p250 = scmp.eq.s32.totalorder %s25, 3
      %p251 = por %p249, %p250
      %p252 = scmp.ne.s32.totalorder %s243, %s244
      %p253 = scmp.eq.s32.totalorder %s25, 0
      %p254 = por %p252, %p253
      %p255 = scmp.ne.s32.totalorder %s243, %s244
      %p256 = scmp.eq.s32.totalorder %s26, 3
      %p257 = por %p255, %p256
      %p259 = scmp.ne.s32.totalorder %s244, %s258
      %p260 = scmp.eq.s32.totalorder %s26, 0
      %p261 = por %p259, %p260
      %s263 = sadd.s32 %s262, 1
      %p266 = scmp.eq.s32.totalorder %s20, 3
      %p267 = scmp.ne.s32.totalorder %s262, %s264
      %p268 = scmp.eq.s32.totalorder %s20, 0
      %p269 = por %p267, %p268
      %p270 = scmp.ne.s32.totalorder %s262, %s264
      %p271 = scmp.eq.s32.totalorder %s25, 3
      %p272 = por %p270, %p271
      %p273 = scmp.ne.s32.totalorder %s264, %s265
      %p274 = scmp.eq.s32.totalorder %s25, 0
      %p275 = por %p273, %p274
      %p276 = scmp.ne.s32.totalorder %s264, %s265
      %p277 = scmp.eq.s32.totalorder %s26, 3
      %p278 = por %p276, %p277
      %p280 = scmp.ne.s32.totalorder %s265, %s279
      %p281 = scmp.eq.s32.totalorder %s26, 0
      %p282 = por %p280, %p281
      %s283 = ssub.s32 %s27, %s39
      %s284 = ssub.s32 %s28, %s35
      %s285 = sor.u32 %s283, %s284
      %p286 = scmp.eq.s32.totalorder %s285, 0
      %s288 = sadd.s32 %s287, 1
      %s289 = scalar_select %p286, %s287, %s288
      %p292 = pneg %p286
      %p293 = scmp.eq.s32.totalorder %s20, 3
      %p294 = por %p292, %p293
      %p295 = scmp.ne.s32.totalorder %s287, %s290
      %p296 = scmp.eq.s32.totalorder %s20, 0
      %p297 = por %p295, %p296
      %p298 = scmp.ne.s32.totalorder %s287, %s290
      %p299 = scmp.eq.s32.totalorder %s25, 3
      %p300 = por %p298, %p299
      %p301 = scmp.ne.s32.totalorder %s290, %s291
      %p302 = scmp.eq.s32.totalorder %s25, 0
      %p303 = por %p301, %p302
      %p304 = scmp.ne.s32.totalorder %s290, %s291
      %p305 = scmp.eq.s32.totalorder %s26, 3
      %p306 = por %p304, %p305
      %p308 = scmp.ne.s32.totalorder %s291, %s307
      %p309 = scmp.eq.s32.totalorder %s26, 0
      %p310 = por %p308, %p309
      %p311 = scmp.le.s32.totalorder 1, %s20
      %p312 = scmp.lt.s32.totalorder %s20, 5
      %p313 = pnand %p311, %p312
      %p314 = pneg %p313
      // Predicated region
      $region9: #{graph_attention_union.1} parent=5 // pred_check
        _
      $region10: #{graph_attention_union.1} parent=5 // pred_check_branch
        %316 = sbr.rel (%p313) target = $region12
      $region11: #{graph_attention_union.1} parent=5 // pred_region
        %s317 = ssub.s32 %s20, 1
        // Predicated region
        $region13: #{graph_attention_union.1} parent=11 // pred_check
          %p318 = pneg %p107
        $region14: #{graph_attention_union.1} parent=11 // pred_check_branch
          %320 = sbr.rel (%p318) target = $region16
        $region15: #{graph_attention_union.1} parent=11 // pred_region
          _
        $region16: #{graph_attention_union.1} parent=11 // pred_fallthru
          _
        // Predicated region
        $region17: #{graph_attention_union.1} parent=11 // pred_check
          %p321 = pneg %p128
        $region18: #{graph_attention_union.1} parent=11 // pred_check_branch
          %323 = sbr.rel (%p321) target = $region20
        $region19: #{graph_attention_union.1} parent=11 // pred_region
          _
        $region20: #{graph_attention_union.1} parent=11 // pred_fallthru
          _
        // Predicated region
        $region21: #{graph_attention_union.1} parent=11 // pred_check
          %p324 = pneg %p149
        $region22: #{graph_attention_union.1} parent=11 // pred_check_branch
          %326 = sbr.rel (%p324) target = $region24
        $region23: #{graph_attention_union.1} parent=11 // pred_region
          _
        $region24: #{graph_attention_union.1} parent=11 // pred_fallthru
          _
        // Predicated region
        $region25: #{graph_attention_union.1} parent=11 // pred_check
          %p327 = pneg %p170
        $region26: #{graph_attention_union.1} parent=11 // pred_check_branch
          %329 = sbr.rel (%p327) target = $region28
        $region27: #{graph_attention_union.1} parent=11 // pred_region
          _
        $region28: #{graph_attention_union.1} parent=11 // pred_fallthru
          _
        // Predicated region
        $region29: #{graph_attention_union.1} parent=11 // pred_check
          %p330 = pneg %p191
        $region30: #{graph_attention_union.1} parent=11 // pred_check_branch
          %332 = sbr.rel (%p330) target = $region32
        $region31: #{graph_attention_union.1} parent=11 // pred_region
          _
        $region32: #{graph_attention_union.1} parent=11 // pred_fallthru
          _
        // Predicated region
        $region33: #{graph_attention_union.1} parent=11 // pred_check
          %p333 = pneg %p212
        $region34: #{graph_attention_union.1} parent=11 // pred_check_branch
          %335 = sbr.rel (%p333) target = $region36
        $region35: #{graph_attention_union.1} parent=11 // pred_region
          _
        $region36: #{graph_attention_union.1} parent=11 // pred_fallthru
          _
        // Predicated region
        $region37: #{graph_attention_union.1} parent=11 // pred_check
          %p336 = pneg %p233
        $region38: #{graph_attention_union.1} parent=11 // pred_check_branch
          %338 = sbr.rel (%p336) target = $region40
        $region39: #{graph_attention_union.1} parent=11 // pred_region
          _
        $region40: #{graph_attention_union.1} parent=11 // pred_fallthru
          _
        // Predicated region
        $region41: #{graph_attention_union.1} parent=11 // pred_check
          %p339 = pneg %p254
        $region42: #{graph_attention_union.1} parent=11 // pred_check_branch
          %341 = sbr.rel (%p339) target = $region44
        $region43: #{graph_attention_union.1} parent=11 // pred_region
          _
        $region44: #{graph_attention_union.1} parent=11 // pred_fallthru
          _
        // Predicated region
        $region45: #{graph_attention_union.1} parent=11 // pred_check
          %p342 = pneg %p275
        $region46: #{graph_attention_union.1} parent=11 // pred_check_branch
          %344 = sbr.rel (%p342) target = $region48
        $region47: #{graph_attention_union.1} parent=11 // pred_region
          _
        $region48: #{graph_attention_union.1} parent=11 // pred_fallthru
          _
      $region12: #{graph_attention_union.1} parent=5 // pred_fallthru
        _
      %p345 = scmp.lt.s32.totalorder %s20, 4
      // Predicated region
      $region49: #{graph_attention_union.1} parent=5 // pred_check
        %p346 = pneg %p345
      $region50: #{graph_attention_union.1} parent=5 // pred_check_branch
        %348 = sbr.rel (%p346) target = $region52
      $region51: #{graph_attention_union.1} parent=5 // pred_region
        // Predicated region
        $region53: #{graph_attention_union.1} parent=51 // pred_check
          %p349 = pneg %p54
        $region54: #{graph_attention_union.1} parent=51 // pred_check_branch
          %351 = sbr.rel (%p349) target = $region56
        $region55: #{graph_attention_union.1} parent=51 // pred_region
          %s352 = smul.u32 16, %s28
          %p353 = scmp.lt.s32.totalorder %s27, 1
          %s354 = scalar_select %p353, %s27, 1
          %p355 = scmp.lt.s32.totalorder %s352, 31
          %s356 = scalar_select %p355, %s352, 31
          %s357 = smul.addr %s354, 32
          %s358 = sadd.s32 %s356, %s357
          %s359 = smul.addr %s358, 4
          %s360 = scalar_lea.vmem %s0, %s359
          %s361 = smul.u32 16, %s28
        $region56: #{graph_attention_union.1} parent=51 // pred_fallthru
          _
        // Predicated region
        $region57: #{graph_attention_union.1} parent=51 // pred_check
          %p362 = pneg %p80
        $region58: #{graph_attention_union.1} parent=51 // pred_check_branch
          %364 = sbr.rel (%p362) target = $region60
        $region59: #{graph_attention_union.1} parent=51 // pred_region
          %p365 = scmp.lt.s32.totalorder %s27, 1
          %s366 = scalar_select %p365, %s27, 1
          %s367 = smul.addr %s366, 8
          %s368 = smul.addr %s367, 4
          %s369 = scalar_lea.vmem %s1, %s368
        $region60: #{graph_attention_union.1} parent=51 // pred_fallthru
          _
      $region52: #{graph_attention_union.1} parent=5 // pred_fallthru
        _
      %p370 = scmp.le.s32.totalorder 1, %s20
      %p371 = scmp.lt.s32.totalorder %s20, 5
      %p372 = pnand %p370, %p371
      %p373 = pneg %p372
      // Predicated region
      $region61: #{graph_attention_union.1} parent=5 // pred_check
        _
      $region62: #{graph_attention_union.1} parent=5 // pred_check_branch
        %375 = sbr.rel (%p372) target = $region64
      $region63: #{graph_attention_union.1} parent=5 // pred_region
        %s376 = ssub.s32 %s20, 1
        %s377 = smul.u32 16, %s30
        %p378 = scmp.lt.s32.totalorder %s29, 1
        %s379 = scalar_select %p378, %s29, 1
        %p380 = scmp.lt.s32.totalorder %s377, 31
        %s381 = scalar_select %p380, %s377, 31
        %s382 = smul.addr %s379, 32
        %s383 = sadd.s32 %s381, %s382
        %s384 = smul.addr %s383, 4
        %s385 = scalar_lea.vmem %s0, %s384
        %p386 = pneg %p60
        %p387 = pneg %p57
        %p388 = scmp.lt.s32.totalorder %s29, 1
        %s389 = scalar_select %p388, %s29, 1
        %s390 = smul.addr %s389, 8
        %s391 = smul.addr %s390, 4
        %s392 = scalar_lea.vmem %s1, %s391
        %p393 = pneg %p86
        %p394 = pneg %p83
        %p395 = pneg %p107
        %p396 = pneg %p104
        %p397 = pneg %p128
        %p398 = pneg %p125
        %p399 = pneg %p149
        %p400 = pneg %p146
        %p401 = pneg %p170
        %p402 = pneg %p167
        %p403 = pneg %p191
        %p404 = pneg %p188
        %p405 = pneg %p212
        %p406 = pneg %p209
        %p407 = pneg %p233
        %p408 = pneg %p230
        %p409 = pneg %p254
        %p410 = pneg %p251
        %p411 = pneg %p275
        %p412 = pneg %p272
        %p413 = pneg %p303
        %p414 = pneg %p300
        %s415 = sand.u32 %s290, 1
        %s416 = scalar_lea.sflag [#allocation3], %s415
        %s417 = sand.u32 %s290, 1
        %s418 = smul.addr %s417, 128
        %s419 = scalar_lea.vmem [#allocation2], %s418
        %s420 = smul.u32 16, %s30
        %p421 = scmp.lt.s32.totalorder %s29, 1
        %s422 = scalar_select %p421, %s29, 1
        %p423 = scmp.lt.s32.totalorder %s420, 31
        %s424 = scalar_select %p423, %s420, 31
        %s425 = smul.addr %s422, 32
        %s426 = sadd.s32 %s424, %s425
        %s427 = smul.addr %s426, 4
        %s428 = scalar_lea.vmem %s0, %s427
        %s429 = smul.u32 16, %s30
        %p430 = scmp.lt.s32.totalorder %s29, 1
        %s431 = scalar_select %p430, %s29, 1
        %s432 = smul.addr %s431, 8
        %s433 = smul.addr %s432, 4
        %s434 = scalar_lea.vmem %s1, %s433
        %s435 = smul.u32 16, %s30
        %v437 = vld [vmem:[%s428] sm:$0xf]
        %v438 = vld [vmem:[%s428 + $0x4] sm:$0xf]
        %v439 = vld [vmem:[%s428 + $0x8] sm:$0xf]
        %v440 = vld [vmem:[%s428 + $0xc] sm:$0xf]
        %v441 = vld [vmem:[%s428 + $0x10] sm:$0xf]
        %v442 = vld [vmem:[%s428 + $0x14] sm:$0xf]
        %v443 = vld [vmem:[%s428 + $0x18] sm:$0xf]
        %v444 = vld [vmem:[%s428 + $0x1c] sm:$0xf]
        %v445 = vld [vmem:[%s428 + $0x20] sm:$0xf]
        %v446 = vld [vmem:[%s428 + $0x24] sm:$0xf]
        %v447 = vld [vmem:[%s428 + $0x28] sm:$0xf]
        %v448 = vld [vmem:[%s428 + $0x2c] sm:$0xf]
        %v449 = vld [vmem:[%s428 + $0x30] sm:$0xf]
        %v450 = vld [vmem:[%s428 + $0x34] sm:$0xf]
        %v451 = vld [vmem:[%s428 + $0x38] sm:$0xf]
        %v452 = vld [vmem:[%s428 + $0x3c] sm:$0xf]
        %v453 = vld [vmem:[%s434] sm:$0xf]
        %v454 = vld [vmem:[%s434 + $0x4] sm:$0xf]
        %v455 = vld [vmem:[%s434 + $0x8] sm:$0xf]
        %v456 = vld [vmem:[%s434 + $0xc] sm:$0xf]
        %v457 = vld [vmem:[%s434 + $0x10] sm:$0xf]
        %v458 = vld [vmem:[%s434 + $0x14] sm:$0xf]
        %v459 = vld [vmem:[%s434 + $0x18] sm:$0xf]
        %v460 = vld [vmem:[%s434 + $0x1c] sm:$0xf]
        %v461 = vld [vmem:[%s2] sm:$0xf]
        %v462 = vld [vmem:[%s2 + $0x4] sm:$0xf]
        %v463 = vld [vmem:[%s2 + $0x8] sm:$0xf]
        %v464 = vld [vmem:[%s2 + $0xc] sm:$0xf]
        %v465 = vld [vmem:[%s2 + $0x10] sm:$0xf]
        %v466 = vld [vmem:[%s2 + $0x14] sm:$0xf]
        %v467 = vld [vmem:[%s2 + $0x18] sm:$0xf]
        %v468 = vld [vmem:[%s2 + $0x1c] sm:$0xf]
        %v469 = vld [vmem:[%s2 + $0x20] sm:$0xf]
        %v470 = vld [vmem:[%s2 + $0x24] sm:$0xf]
        %v471 = vld [vmem:[%s2 + $0x28] sm:$0xf]
        %v472 = vld [vmem:[%s2 + $0x2c] sm:$0xf]
        %v473 = vld [vmem:[%s2 + $0x30] sm:$0xf]
        %v474 = vld [vmem:[%s2 + $0x34] sm:$0xf]
        %v475 = vld [vmem:[%s2 + $0x38] sm:$0xf]
        %v476 = vld [vmem:[%s2 + $0x3c] sm:$0xf]
        %v477 = vld [vmem:[%s3] sm:$0x1]
        %v479 = vlaneseq
        %v480 = vshrl.u32 %v479, 7
        %v481 = vsub.s32 0, %v480
        %v482 = vrot.slane %v477, %v481
        %v500 = vunpack.c.l.b16 %v437
        %v501 = vunpack.c.l.b16 %v438
        %v502 = vunpack.c.l.b16 %v439
        %v503 = vunpack.c.l.b16 %v440
        %v504 = vunpack.c.l.b16 %v441
        %v505 = vunpack.c.l.b16 %v442
        %v506 = vunpack.c.l.b16 %v443
        %v507 = vunpack.c.l.b16 %v444
        %v508 = vunpack.c.l.b16 %v445
        %v509 = vunpack.c.l.b16 %v446
        %v510 = vunpack.c.l.b16 %v447
        %v511 = vunpack.c.l.b16 %v448
        %v512 = vunpack.c.l.b16 %v449
        %v513 = vunpack.c.l.b16 %v450
        %v514 = vunpack.c.l.b16 %v451
        %v515 = vunpack.c.l.b16 %v452
        %v516 = vpack.c.b16 %v501, %v500
        %v517 = vpack.c.b16 %v503, %v502
        %v518 = vpack.c.b16 %v505, %v504
        %v519 = vpack.c.b16 %v507, %v506
        %v520 = vpack.c.b16 %v509, %v508
        %v521 = vpack.c.b16 %v511, %v510
        %v522 = vpack.c.b16 %v513, %v512
        %v523 = vpack.c.b16 %v515, %v514
        %v548 = vunpack.c.l.b16 %v461
        %v549 = vunpack.c.l.b16 %v462
        %v550 = vunpack.c.l.b16 %v463
        %v551 = vunpack.c.l.b16 %v464
        %v552 = vunpack.c.l.b16 %v465
        %v553 = vunpack.c.l.b16 %v466
        %v554 = vunpack.c.l.b16 %v467
        %v555 = vunpack.c.l.b16 %v468
        %v556 = vunpack.c.l.b16 %v469
        %v557 = vunpack.c.l.b16 %v470
        %v558 = vunpack.c.l.b16 %v471
        %v559 = vunpack.c.l.b16 %v472
        %v560 = vunpack.c.l.b16 %v473
        %v561 = vunpack.c.l.b16 %v474
        %v562 = vunpack.c.l.b16 %v475
        %v563 = vunpack.c.l.b16 %v476
        %v564 = vpack.c.b16 %v549, %v548
        %v565 = vpack.c.b16 %v551, %v550
        %v566 = vpack.c.b16 %v553, %v552
        %v567 = vpack.c.b16 %v555, %v554
        %v568 = vpack.c.b16 %v557, %v556
        %v569 = vpack.c.b16 %v559, %v558
        %v570 = vpack.c.b16 %v561, %v560
        %v571 = vpack.c.b16 %v563, %v562
        %580 = vmatprep.subr.bf16.mxu0 0
        %581 = vmatpush1.bf16.msra.mxu0 %v571
        %582 = vmatprep.subr.bf16.mxu0 0
        %583 = vmatpush1.bf16.msra.mxu0 %v570
        %584 = vmatprep.subr.bf16.mxu0 0
        %585 = vmatpush1.bf16.msra.mxu0 %v569
        %586 = vmatprep.subr.bf16.mxu0 0
        %587 = vmatpush1.bf16.msra.mxu0 %v568
        %588 = vmatprep.subr.bf16.mxu0 0
        %589 = vmatpush1.bf16.msra.mxu0 %v567
        %590 = vmatprep.subr.bf16.mxu0 0
        %591 = vmatpush1.bf16.msra.mxu0 %v566
        %592 = vmatprep.subr.bf16.mxu0 0
        %593 = vmatpush1.bf16.msra.mxu0 %v565
        %594 = vmatprep.subr.bf16.mxu0 0
        %595 = vmatpush1.bf16.msra.mxu0 %v564
        %596 = vmatprep.subr.bf16.mxu0 0
        %597 = vmatpush2.bf16.msra.mxu0 0
        %598 = vmatprep.subr.bf16.mxu0 0
        %599 = vmatpush2.bf16.msra.mxu0 0
        %600 = vmatprep.subr.bf16.mxu0 0
        %601 = vmatpush2.bf16.msra.mxu0 0
        %602 = vmatprep.subr.bf16.mxu0 0
        %603 = vmatpush2.bf16.msra.mxu0 0
        %604 = vmatprep.subr.bf16.mxu0 0
        %605 = vmatpush2.bf16.msra.mxu0 0
        %606 = vmatprep.subr.bf16.mxu0 0
        %607 = vmatpush2.bf16.msra.mxu0 0
        %608 = vmatprep.subr.bf16.mxu0 0
        %609 = vmatpush2.bf16.msra.mxu0 0
        %610 = vmatprep.subr.bf16.mxu0 0
        %611 = vmatpush2.bf16.msra.mxu0 0
        %612 = vmatprep.mubr.bf16.mxu0 0
        %613 = vmatmul.mubr.bf16.gmra.mxu0 %v516
        %v614 = vpop.f32.mrf.mxu0
        %v615 = vadd.f32 %v482, %v614
        %v616 = vpop.f32.mrf.mxu0
        %v617 = vpop.f32.mrf.mxu0
        %v618 = vadd.f32 %v482, %v617
        %v619 = vpop.f32.mrf.mxu0
        %620 = vmatprep.mubr.bf16.mxu0 0
        %621 = vmatmul.mubr.bf16.gmra.mxu0 %v517
        %v622 = vpop.f32.mrf.mxu0
        %v623 = vadd.f32 %v482, %v622
        %v624 = vpop.f32.mrf.mxu0
        %v625 = vpop.f32.mrf.mxu0
        %v626 = vadd.f32 %v482, %v625
        %v627 = vpop.f32.mrf.mxu0
        %628 = vmatprep.mubr.bf16.mxu0 0
        %629 = vmatmul.mubr.bf16.gmra.mxu0 %v518
        %v630 = vpop.f32.mrf.mxu0
        %v631 = vadd.f32 %v482, %v630
        %v632 = vpop.f32.mrf.mxu0
        %v633 = vpop.f32.mrf.mxu0
        %v634 = vadd.f32 %v482, %v633
        %v635 = vpop.f32.mrf.mxu0
        %636 = vmatprep.mubr.bf16.mxu0 0
        %637 = vmatmul.mubr.bf16.gmra.mxu0 %v519
        %v638 = vpop.f32.mrf.mxu0
        %v639 = vadd.f32 %v482, %v638
        %v640 = vpop.f32.mrf.mxu0
        %v641 = vpop.f32.mrf.mxu0
        %v642 = vadd.f32 %v482, %v641
        %v643 = vpop.f32.mrf.mxu0
        %644 = vmatprep.mubr.bf16.mxu0 0
        %645 = vmatmul.mubr.bf16.gmra.mxu0 %v520
        %v646 = vpop.f32.mrf.mxu0
        %v647 = vadd.f32 %v482, %v646
        %v648 = vpop.f32.mrf.mxu0
        %v649 = vpop.f32.mrf.mxu0
        %v650 = vadd.f32 %v482, %v649
        %v651 = vpop.f32.mrf.mxu0
        %652 = vmatprep.mubr.bf16.mxu0 0
        %653 = vmatmul.mubr.bf16.gmra.mxu0 %v521
        %v654 = vpop.f32.mrf.mxu0
        %v655 = vadd.f32 %v482, %v654
        %v656 = vpop.f32.mrf.mxu0
        %v657 = vpop.f32.mrf.mxu0
        %v658 = vadd.f32 %v482, %v657
        %v659 = vpop.f32.mrf.mxu0
        %660 = vmatprep.mubr.bf16.mxu0 0
        %661 = vmatmul.mubr.bf16.gmra.mxu0 %v522
        %v662 = vpop.f32.mrf.mxu0
        %v663 = vadd.f32 %v482, %v662
        %v664 = vpop.f32.mrf.mxu0
        %v665 = vpop.f32.mrf.mxu0
        %v666 = vadd.f32 %v482, %v665
        %v667 = vpop.f32.mrf.mxu0
        %668 = vmatprep.mubr.bf16.mxu0 0
        %669 = vmatmul.mubr.bf16.gmra.mxu0 %v523
        %v670 = vpop.f32.mrf.mxu0
        %v671 = vadd.f32 %v482, %v670
        %v672 = vpop.f32.mrf.mxu0
        %v673 = vpop.f32.mrf.mxu0
        %v674 = vadd.f32 %v482, %v673
        %v675 = vpop.f32.mrf.mxu0
        %676 = vdwg.mxu0
        %v677 = vld [vmem:[%s4] sm:$0xf]
        %v678 = vld [vmem:[%s4 + $0x4] sm:$0xf]
        %v679 = vld [vmem:[%s4 + $0x8] sm:$0xf]
        %v680 = vld [vmem:[%s4 + $0xc] sm:$0xf]
        %v681 = vld [vmem:[%s4 + $0x10] sm:$0xf]
        %v682 = vld [vmem:[%s4 + $0x14] sm:$0xf]
        %v683 = vld [vmem:[%s4 + $0x18] sm:$0xf]
        %v684 = vld [vmem:[%s4 + $0x1c] sm:$0xf]
        %v685 = vld [vmem:[%s4 + $0x20] sm:$0xf]
        %v686 = vld [vmem:[%s4 + $0x24] sm:$0xf]
        %v687 = vld [vmem:[%s4 + $0x28] sm:$0xf]
        %v688 = vld [vmem:[%s4 + $0x2c] sm:$0xf]
        %v689 = vld [vmem:[%s4 + $0x30] sm:$0xf]
        %v690 = vld [vmem:[%s4 + $0x34] sm:$0xf]
        %v691 = vld [vmem:[%s4 + $0x38] sm:$0xf]
        %v692 = vld [vmem:[%s4 + $0x3c] sm:$0xf]
        %v693 = vld [vmem:[%s5] sm:$0x1]
        %v695 = vlaneseq
        %v696 = vshrl.u32 %v695, 7
        %v697 = vsub.s32 0, %v696
        %v698 = vrot.slane %v693, %v697
        %v708 = vunpack.c.l.b16 %v453
        %v709 = vunpack.c.l.b16 %v454
        %v710 = vunpack.c.l.b16 %v455
        %v711 = vunpack.c.l.b16 %v456
        %v712 = vunpack.c.l.b16 %v457
        %v713 = vunpack.c.l.b16 %v458
        %v714 = vunpack.c.l.b16 %v459
        %v715 = vunpack.c.l.b16 %v460
        %v716 = vpack.c.b16 %v709, %v708
        %v717 = vpack.c.b16 %v711, %v710
        %v718 = vpack.c.b16 %v713, %v712
        %v719 = vpack.c.b16 %v715, %v714
        %v740 = vunpack.c.l.b16 %v677
        %v741 = vunpack.c.l.b16 %v678
        %v742 = vunpack.c.l.b16 %v679
        %v743 = vunpack.c.l.b16 %v680
        %v744 = vunpack.c.l.b16 %v681
        %v745 = vunpack.c.l.b16 %v682
        %v746 = vunpack.c.l.b16 %v683
        %v747 = vunpack.c.l.b16 %v684
        %v748 = vunpack.c.l.b16 %v685
        %v749 = vunpack.c.l.b16 %v686
        %v750 = vunpack.c.l.b16 %v687
        %v751 = vunpack.c.l.b16 %v688
        %v752 = vunpack.c.l.b16 %v689
        %v753 = vunpack.c.l.b16 %v690
        %v754 = vunpack.c.l.b16 %v691
        %v755 = vunpack.c.l.b16 %v692
        %v756 = vpack.c.b16 %v741, %v740
        %v757 = vpack.c.b16 %v743, %v742
        %v758 = vpack.c.b16 %v745, %v744
        %v759 = vpack.c.b16 %v747, %v746
        %v760 = vpack.c.b16 %v749, %v748
        %v761 = vpack.c.b16 %v751, %v750
        %v762 = vpack.c.b16 %v753, %v752
        %v763 = vpack.c.b16 %v755, %v754
        %772 = vmatprep.subr.bf16.mxu0 0
        %773 = vmatpush1.bf16.msra.mxu0 %v763
        %774 = vmatprep.subr.bf16.mxu0 0
        %775 = vmatpush1.bf16.msra.mxu0 %v762
        %776 = vmatprep.subr.bf16.mxu0 0
        %777 = vmatpush1.bf16.msra.mxu0 %v761
        %778 = vmatprep.subr.bf16.mxu0 0
        %779 = vmatpush1.bf16.msra.mxu0 %v760
        %780 = vmatprep.subr.bf16.mxu0 0
        %781 = vmatpush1.bf16.msra.mxu0 %v759
        %782 = vmatprep.subr.bf16.mxu0 0
        %783 = vmatpush1.bf16.msra.mxu0 %v758
        %784 = vmatprep.subr.bf16.mxu0 0
        %785 = vmatpush1.bf16.msra.mxu0 %v757
        %786 = vmatprep.subr.bf16.mxu0 0
        %787 = vmatpush1.bf16.msra.mxu0 %v756
        %788 = vmatprep.subr.bf16.mxu0 0
        %789 = vmatpush2.bf16.msra.mxu0 0
        %790 = vmatprep.subr.bf16.mxu0 0
        %791 = vmatpush2.bf16.msra.mxu0 0
        %792 = vmatprep.subr.bf16.mxu0 0
        %793 = vmatpush2.bf16.msra.mxu0 0
        %794 = vmatprep.subr.bf16.mxu0 0
        %795 = vmatpush2.bf16.msra.mxu0 0
        %796 = vmatprep.subr.bf16.mxu0 0
        %797 = vmatpush2.bf16.msra.mxu0 0
        %798 = vmatprep.subr.bf16.mxu0 0
        %799 = vmatpush2.bf16.msra.mxu0 0
        %800 = vmatprep.subr.bf16.mxu0 0
        %801 = vmatpush2.bf16.msra.mxu0 0
        %802 = vmatprep.subr.bf16.mxu0 0
        %803 = vmatpush2.bf16.msra.mxu0 0
        %804 = vmatprep.mubr.bf16.mxu0 0
        %805 = vmatmul.mubr.bf16.gmra.mxu0 %v716
        %v806 = vpop.f32.mrf.mxu0
        %v807 = vadd.f32 %v698, %v806
        %v808 = vpop.f32.mrf.mxu0
        %v809 = vpop.f32.mrf.mxu0
        %v810 = vadd.f32 %v698, %v809
        %v811 = vpop.f32.mrf.mxu0
        %812 = vmatprep.mubr.bf16.mxu0 0
        %813 = vmatmul.mubr.bf16.gmra.mxu0 %v717
        %v814 = vpop.f32.mrf.mxu0
        %v815 = vadd.f32 %v698, %v814
        %v816 = vpop.f32.mrf.mxu0
        %v817 = vpop.f32.mrf.mxu0
        %v818 = vadd.f32 %v698, %v817
        %v819 = vpop.f32.mrf.mxu0
        %820 = vmatprep.mubr.bf16.mxu0 0
        %821 = vmatmul.mubr.bf16.gmra.mxu0 %v718
        %v822 = vpop.f32.mrf.mxu0
        %v823 = vadd.f32 %v698, %v822
        %v824 = vpop.f32.mrf.mxu0
        %v825 = vpop.f32.mrf.mxu0
        %v826 = vadd.f32 %v698, %v825
        %v827 = vpop.f32.mrf.mxu0
        %828 = vmatprep.mubr.bf16.mxu0 0
        %829 = vmatmul.mubr.bf16.gmra.mxu0 %v719
        %v830 = vpop.f32.mrf.mxu0
        %v831 = vadd.f32 %v698, %v830
        %v832 = vpop.f32.mrf.mxu0
        %v833 = vpop.f32.mrf.mxu0
        %v834 = vadd.f32 %v698, %v833
        %v835 = vpop.f32.mrf.mxu0
        %836 = vdwg.mxu0
        %v837 = vld [vmem:[%s6] sm:$0xf]
        %v838 = vld [vmem:[%s6 + $0x4] sm:$0xf]
        %v839 = vld [vmem:[%s6 + $0x8] sm:$0xf]
        %v840 = vld [vmem:[%s6 + $0xc] sm:$0xf]
        %v841 = vld [vmem:[%s6 + $0x10] sm:$0xf]
        %v842 = vld [vmem:[%s6 + $0x14] sm:$0xf]
        %v843 = vld [vmem:[%s6 + $0x18] sm:$0xf]
        %v844 = vld [vmem:[%s6 + $0x1c] sm:$0xf]
        %v845 = vld [vmem:[%s6 + $0x20] sm:$0xf]
        %v846 = vld [vmem:[%s6 + $0x24] sm:$0xf]
        %v847 = vld [vmem:[%s6 + $0x28] sm:$0xf]
        %v848 = vld [vmem:[%s6 + $0x2c] sm:$0xf]
        %v849 = vld [vmem:[%s6 + $0x30] sm:$0xf]
        %v850 = vld [vmem:[%s6 + $0x34] sm:$0xf]
        %v851 = vld [vmem:[%s6 + $0x38] sm:$0xf]
        %v852 = vld [vmem:[%s6 + $0x3c] sm:$0xf]
        %v853 = vld [vmem:[%s7] sm:$0x1]
        %v855 = vlaneseq
        %v856 = vshrl.u32 %v855, 7
        %v857 = vsub.s32 0, %v856
        %v858 = vrot.slane %v853, %v857
        %v876 = vunpack.c.l.b16 %v837
        %v877 = vunpack.c.l.b16 %v838
        %v878 = vunpack.c.l.b16 %v839
        %v879 = vunpack.c.l.b16 %v840
        %v880 = vunpack.c.l.b16 %v841
        %v881 = vunpack.c.l.b16 %v842
        %v882 = vunpack.c.l.b16 %v843
        %v883 = vunpack.c.l.b16 %v844
        %v884 = vunpack.c.l.b16 %v845
        %v885 = vunpack.c.l.b16 %v846
        %v886 = vunpack.c.l.b16 %v847
        %v887 = vunpack.c.l.b16 %v848
        %v888 = vunpack.c.l.b16 %v849
        %v889 = vunpack.c.l.b16 %v850
        %v890 = vunpack.c.l.b16 %v851
        %v891 = vunpack.c.l.b16 %v852
        %v892 = vpack.c.b16 %v877, %v876
        %v893 = vpack.c.b16 %v879, %v878
        %v894 = vpack.c.b16 %v881, %v880
        %v895 = vpack.c.b16 %v883, %v882
        %v896 = vpack.c.b16 %v885, %v884
        %v897 = vpack.c.b16 %v887, %v886
        %v898 = vpack.c.b16 %v889, %v888
        %v899 = vpack.c.b16 %v891, %v890
        %908 = vmatprep.subr.bf16.mxu0 0
        %909 = vmatpush1.bf16.msra.mxu0 %v899
        %910 = vmatprep.subr.bf16.mxu0 0
        %911 = vmatpush1.bf16.msra.mxu0 %v898
        %912 = vmatprep.subr.bf16.mxu0 0
        %913 = vmatpush1.bf16.msra.mxu0 %v897
        %914 = vmatprep.subr.bf16.mxu0 0
        %915 = vmatpush1.bf16.msra.mxu0 %v896
        %916 = vmatprep.subr.bf16.mxu0 0
        %917 = vmatpush1.bf16.msra.mxu0 %v895
        %918 = vmatprep.subr.bf16.mxu0 0
        %919 = vmatpush1.bf16.msra.mxu0 %v894
        %920 = vmatprep.subr.bf16.mxu0 0
        %921 = vmatpush1.bf16.msra.mxu0 %v893
        %922 = vmatprep.subr.bf16.mxu0 0
        %923 = vmatpush1.bf16.msra.mxu0 %v892
        %924 = vmatprep.subr.bf16.mxu0 0
        %925 = vmatpush2.bf16.msra.mxu0 0
        %926 = vmatprep.subr.bf16.mxu0 0
        %927 = vmatpush2.bf16.msra.mxu0 0
        %928 = vmatprep.subr.bf16.mxu0 0
        %929 = vmatpush2.bf16.msra.mxu0 0
        %930 = vmatprep.subr.bf16.mxu0 0
        %931 = vmatpush2.bf16.msra.mxu0 0
        %932 = vmatprep.subr.bf16.mxu0 0
        %933 = vmatpush2.bf16.msra.mxu0 0
        %934 = vmatprep.subr.bf16.mxu0 0
        %935 = vmatpush2.bf16.msra.mxu0 0
        %936 = vmatprep.subr.bf16.mxu0 0
        %937 = vmatpush2.bf16.msra.mxu0 0
        %938 = vmatprep.subr.bf16.mxu0 0
        %939 = vmatpush2.bf16.msra.mxu0 0
        %940 = vmatprep.mubr.bf16.mxu0 0
        %941 = vmatmul.mubr.bf16.gmra.mxu0 %v516
        %v942 = vpop.f32.mrf.mxu0
        %v943 = vadd.f32 %v858, %v942
        %v944 = vpop.f32.mrf.mxu0
        %v945 = vpop.f32.mrf.mxu0
        %v946 = vadd.f32 %v858, %v945
        %v947 = vpop.f32.mrf.mxu0
        %948 = vmatprep.mubr.bf16.mxu0 0
        %949 = vmatmul.mubr.bf16.gmra.mxu0 %v517
        %v950 = vpop.f32.mrf.mxu0
        %v951 = vadd.f32 %v858, %v950
        %v952 = vpop.f32.mrf.mxu0
        %v953 = vpop.f32.mrf.mxu0
        %v954 = vadd.f32 %v858, %v953
        %v955 = vpop.f32.mrf.mxu0
        %956 = vmatprep.mubr.bf16.mxu0 0
        %957 = vmatmul.mubr.bf16.gmra.mxu0 %v518
        %v958 = vpop.f32.mrf.mxu0
        %v959 = vadd.f32 %v858, %v958
        %v960 = vpop.f32.mrf.mxu0
        %v961 = vpop.f32.mrf.mxu0
        %v962 = vadd.f32 %v858, %v961
        %v963 = vpop.f32.mrf.mxu0
        %964 = vmatprep.mubr.bf16.mxu0 0
        %965 = vmatmul.mubr.bf16.gmra.mxu0 %v519
        %v966 = vpop.f32.mrf.mxu0
        %v967 = vadd.f32 %v858, %v966
        %v968 = vpop.f32.mrf.mxu0
        %v969 = vpop.f32.mrf.mxu0
        %v970 = vadd.f32 %v858, %v969
        %v971 = vpop.f32.mrf.mxu0
        %972 = vmatprep.mubr.bf16.mxu0 0
        %973 = vmatmul.mubr.bf16.gmra.mxu0 %v520
        %v974 = vpop.f32.mrf.mxu0
        %v975 = vadd.f32 %v858, %v974
        %v976 = vpop.f32.mrf.mxu0
        %v977 = vpop.f32.mrf.mxu0
        %v978 = vadd.f32 %v858, %v977
        %v979 = vpop.f32.mrf.mxu0
        %980 = vmatprep.mubr.bf16.mxu0 0
        %981 = vmatmul.mubr.bf16.gmra.mxu0 %v521
        %v982 = vpop.f32.mrf.mxu0
        %v983 = vadd.f32 %v858, %v982
        %v984 = vpop.f32.mrf.mxu0
        %v985 = vpop.f32.mrf.mxu0
        %v986 = vadd.f32 %v858, %v985
        %v987 = vpop.f32.mrf.mxu0
        %988 = vmatprep.mubr.bf16.mxu0 0
        %989 = vmatmul.mubr.bf16.gmra.mxu0 %v522
        %v990 = vpop.f32.mrf.mxu0
        %v991 = vadd.f32 %v858, %v990
        %v992 = vpop.f32.mrf.mxu0
        %v993 = vpop.f32.mrf.mxu0
        %v994 = vadd.f32 %v858, %v993
        %v995 = vpop.f32.mrf.mxu0
        %996 = vmatprep.mubr.bf16.mxu0 0
        %997 = vmatmul.mubr.bf16.gmra.mxu0 %v523
        %v998 = vpop.f32.mrf.mxu0
        %v999 = vadd.f32 %v858, %v998
        %v1000 = vpop.f32.mrf.mxu0
        %v1001 = vpop.f32.mrf.mxu0
        %v1002 = vadd.f32 %v858, %v1001
        %v1003 = vpop.f32.mrf.mxu0
        %1004 = vdwg.mxu0
        %v1005 = vmax.f32 %v943, 0.0
        %v1006 = vmax.f32 %v946, 0.0
        %v1007 = vmax.f32 %v951, 0.0
        %v1008 = vmax.f32 %v954, 0.0
        %v1009 = vmax.f32 %v959, 0.0
        %v1010 = vmax.f32 %v962, 0.0
        %v1011 = vmax.f32 %v967, 0.0
        %v1012 = vmax.f32 %v970, 0.0
        %v1013 = vmax.f32 %v975, 0.0
        %v1014 = vmax.f32 %v978, 0.0
        %v1015 = vmax.f32 %v983, 0.0
        %v1016 = vmax.f32 %v986, 0.0
        %v1017 = vmax.f32 %v991, 0.0
        %v1018 = vmax.f32 %v994, 0.0
        %v1019 = vmax.f32 %v999, 0.0
        %v1020 = vmax.f32 %v1002, 0.0
        %1021 = vmatprep.subr.bf16.mxu0 0
        %1022 = vmatpush1.bf16.msra.mxu0 %v899
        %1023 = vmatprep.subr.bf16.mxu0 0
        %1024 = vmatpush1.bf16.msra.mxu0 %v898
        %1025 = vmatprep.subr.bf16.mxu0 0
        %1026 = vmatpush1.bf16.msra.mxu0 %v897
        %1027 = vmatprep.subr.bf16.mxu0 0
        %1028 = vmatpush1.bf16.msra.mxu0 %v896
        %1029 = vmatprep.subr.bf16.mxu0 0
        %1030 = vmatpush1.bf16.msra.mxu0 %v895
        %1031 = vmatprep.subr.bf16.mxu0 0
        %1032 = vmatpush1.bf16.msra.mxu0 %v894
        %1033 = vmatprep.subr.bf16.mxu0 0
        %1034 = vmatpush1.bf16.msra.mxu0 %v893
        %1035 = vmatprep.subr.bf16.mxu0 0
        %1036 = vmatpush1.bf16.msra.mxu0 %v892
        %1037 = vmatprep.subr.bf16.mxu0 0
        %1038 = vmatpush2.bf16.msra.mxu0 0
        %1039 = vmatprep.subr.bf16.mxu0 0
        %1040 = vmatpush2.bf16.msra.mxu0 0
        %1041 = vmatprep.subr.bf16.mxu0 0
        %1042 = vmatpush2.bf16.msra.mxu0 0
        %1043 = vmatprep.subr.bf16.mxu0 0
        %1044 = vmatpush2.bf16.msra.mxu0 0
        %1045 = vmatprep.subr.bf16.mxu0 0
        %1046 = vmatpush2.bf16.msra.mxu0 0
        %1047 = vmatprep.subr.bf16.mxu0 0
        %1048 = vmatpush2.bf16.msra.mxu0 0
        %1049 = vmatprep.subr.bf16.mxu0 0
        %1050 = vmatpush2.bf16.msra.mxu0 0
        %1051 = vmatprep.subr.bf16.mxu0 0
        %1052 = vmatpush2.bf16.msra.mxu0 0
        %1053 = vmatprep.mubr.bf16.mxu0 0
        %1054 = vmatmul.mubr.bf16.gmra.mxu0 %v716
        %v1055 = vpop.f32.mrf.mxu0
        %v1056 = vadd.f32 %v858, %v1055
        %v1057 = vpop.f32.mrf.mxu0
        %v1058 = vpop.f32.mrf.mxu0
        %v1059 = vadd.f32 %v858, %v1058
        %v1060 = vpop.f32.mrf.mxu0
        %1061 = vmatprep.mubr.bf16.mxu0 0
        %1062 = vmatmul.mubr.bf16.gmra.mxu0 %v717
        %v1063 = vpop.f32.mrf.mxu0
        %v1064 = vadd.f32 %v858, %v1063
        %v1065 = vpop.f32.mrf.mxu0
        %v1066 = vpop.f32.mrf.mxu0
        %v1067 = vadd.f32 %v858, %v1066
        %v1068 = vpop.f32.mrf.mxu0
        %1069 = vmatprep.mubr.bf16.mxu0 0
        %1070 = vmatmul.mubr.bf16.gmra.mxu0 %v718
        %v1071 = vpop.f32.mrf.mxu0
        %v1072 = vadd.f32 %v858, %v1071
        %v1073 = vpop.f32.mrf.mxu0
        %v1074 = vpop.f32.mrf.mxu0
        %v1075 = vadd.f32 %v858, %v1074
        %v1076 = vpop.f32.mrf.mxu0
        %1077 = vmatprep.mubr.bf16.mxu0 0
        %1078 = vmatmul.mubr.bf16.gmra.mxu0 %v719
        %v1079 = vpop.f32.mrf.mxu0
        %v1080 = vadd.f32 %v858, %v1079
        %v1081 = vpop.f32.mrf.mxu0
        %v1082 = vpop.f32.mrf.mxu0
        %v1083 = vadd.f32 %v858, %v1082
        %v1084 = vpop.f32.mrf.mxu0
        %1085 = vdwg.mxu0
        %v1086 = vmax.f32 %v1056, 0.0
        %v1087 = vmax.f32 %v1059, 0.0
        %v1088 = vmax.f32 %v1064, 0.0
        %v1089 = vmax.f32 %v1067, 0.0
        %v1090 = vmax.f32 %v1072, 0.0
        %v1091 = vmax.f32 %v1075, 0.0
        %v1092 = vmax.f32 %v1080, 0.0
        %v1093 = vmax.f32 %v1083, 0.0
        %v1094 = vpack.c.bf16 %v618, %v615
        %v1095 = vpack.c.bf16 %v626, %v623
        %v1096 = vpack.c.bf16 %v634, %v631
        %v1097 = vpack.c.bf16 %v642, %v639
        %v1098 = vpack.c.bf16 %v650, %v647
        %v1099 = vpack.c.bf16 %v658, %v655
        %v1100 = vpack.c.bf16 %v666, %v663
        %v1101 = vpack.c.bf16 %v674, %v671
        %v1102 = vpack.c.bf16 %v810, %v807
        %v1103 = vpack.c.bf16 %v818, %v815
        %v1104 = vpack.c.bf16 %v826, %v823
        %v1105 = vpack.c.bf16 %v834, %v831
        %1106 = vmatprep.subr.bf16.mxu0 0
        %1107 = vmatpush1.bf16.xpose.msra.mxu0 0
        %1108 = vmatprep.subr.bf16.mxu0 0
        %1109 = vmatpush1.bf16.xpose.msra.mxu0 0
        %1110 = vmatprep.subr.bf16.mxu0 0
        %1111 = vmatpush1.bf16.xpose.msra.mxu0 0
        %1112 = vmatprep.subr.bf16.mxu0 0
        %1113 = vmatpush1.bf16.xpose.msra.mxu0 0
        %1114 = vmatprep.subr.bf16.mxu0 0
        %1115 = vmatpush1.bf16.xpose.msra.mxu0 %v1105
        %1116 = vmatprep.subr.bf16.mxu0 0
        %1117 = vmatpush1.bf16.xpose.msra.mxu0 %v1104
        %1118 = vmatprep.subr.bf16.mxu0 0
        %1119 = vmatpush1.bf16.xpose.msra.mxu0 %v1103
        %1120 = vmatprep.subr.bf16.mxu0 0
        %1121 = vmatpush1.bf16.xpose.msra.mxu0 %v1102
        %1122 = vmatprep.subr.bf16.mxu0 0
        %1123 = vmatpush2.bf16.xpose.msra.mxu0 0
        %1124 = vmatprep.subr.bf16.mxu0 0
        %1125 = vmatpush2.bf16.xpose.msra.mxu0 0
        %1126 = vmatprep.subr.bf16.mxu0 0
        %1127 = vmatpush2.bf16.xpose.msra.mxu0 0
        %1128 = vmatprep.subr.bf16.mxu0 0
        %1129 = vmatpush2.bf16.xpose.msra.mxu0 0
        %1130 = vmatprep.subr.bf16.mxu0 0
        %1131 = vmatpush2.bf16.xpose.msra.mxu0 0
        %1132 = vmatprep.subr.bf16.mxu0 0
        %1133 = vmatpush2.bf16.xpose.msra.mxu0 0
        %1134 = vmatprep.subr.bf16.mxu0 0
        %1135 = vmatpush2.bf16.xpose.msra.mxu0 0
        %1136 = vmatprep.subr.bf16.mxu0 0
        %1137 = vmatpush2.bf16.xpose.msra.mxu0 0
        %1138 = vmatprep.mubr.bf16.mxu0 0
        %1139 = vmatmul.mubr.bf16.gmra.mxu0 %v1094
        %v1140 = vpop.f32.mrf.mxu0
        %v1141 = vadd.f32 0.0, %v1140
        %v1142 = vpop.f32.mrf.mxu0
        %v1143 = vpop.f32.mrf.mxu0
        %v1144 = vadd.f32 0.0, %v1143
        %v1145 = vpop.f32.mrf.mxu0
        %1146 = vmatprep.mubr.bf16.mxu0 0
        %1147 = vmatmul.mubr.bf16.gmra.mxu0 %v1095
        %v1148 = vpop.f32.mrf.mxu0
        %v1149 = vadd.f32 0.0, %v1148
        %v1150 = vpop.f32.mrf.mxu0
        %v1151 = vpop.f32.mrf.mxu0
        %v1152 = vadd.f32 0.0, %v1151
        %v1153 = vpop.f32.mrf.mxu0
        %1154 = vmatprep.mubr.bf16.mxu0 0
        %1155 = vmatmul.mubr.bf16.gmra.mxu0 %v1096
        %v1156 = vpop.f32.mrf.mxu0
        %v1157 = vadd.f32 0.0, %v1156
        %v1158 = vpop.f32.mrf.mxu0
        %v1159 = vpop.f32.mrf.mxu0
        %v1160 = vadd.f32 0.0, %v1159
        %v1161 = vpop.f32.mrf.mxu0
        %1162 = vmatprep.mubr.bf16.mxu0 0
        %1163 = vmatmul.mubr.bf16.gmra.mxu0 %v1097
        %v1164 = vpop.f32.mrf.mxu0
        %v1165 = vadd.f32 0.0, %v1164
        %v1166 = vpop.f32.mrf.mxu0
        %v1167 = vpop.f32.mrf.mxu0
        %v1168 = vadd.f32 0.0, %v1167
        %v1169 = vpop.f32.mrf.mxu0
        %1170 = vmatprep.mubr.bf16.mxu0 0
        %1171 = vmatmul.mubr.bf16.gmra.mxu0 %v1098
        %v1172 = vpop.f32.mrf.mxu0
        %v1173 = vadd.f32 0.0, %v1172
        %v1174 = vpop.f32.mrf.mxu0
        %v1175 = vpop.f32.mrf.mxu0
        %v1176 = vadd.f32 0.0, %v1175
        %v1177 = vpop.f32.mrf.mxu0
        %1178 = vmatprep.mubr.bf16.mxu0 0
        %1179 = vmatmul.mubr.bf16.gmra.mxu0 %v1099
        %v1180 = vpop.f32.mrf.mxu0
        %v1181 = vadd.f32 0.0, %v1180
        %v1182 = vpop.f32.mrf.mxu0
        %v1183 = vpop.f32.mrf.mxu0
        %v1184 = vadd.f32 0.0, %v1183
        %v1185 = vpop.f32.mrf.mxu0
        %1186 = vmatprep.mubr.bf16.mxu0 0
        %1187 = vmatmul.mubr.bf16.gmra.mxu0 %v1100
        %v1188 = vpop.f32.mrf.mxu0
        %v1189 = vadd.f32 0.0, %v1188
        %v1190 = vpop.f32.mrf.mxu0
        %v1191 = vpop.f32.mrf.mxu0
        %v1192 = vadd.f32 0.0, %v1191
        %v1193 = vpop.f32.mrf.mxu0
        %1194 = vmatprep.mubr.bf16.mxu0 0
        %1195 = vmatmul.mubr.bf16.gmra.mxu0 %v1101
        %v1196 = vpop.f32.mrf.mxu0
        %v1197 = vadd.f32 0.0, %v1196
        %v1198 = vpop.f32.mrf.mxu0
        %v1199 = vpop.f32.mrf.mxu0
        %v1200 = vadd.f32 0.0, %v1199
        %v1201 = vpop.f32.mrf.mxu0
        %1202 = vdwg.mxu0
        %vm1203 = vcmask 523264
        %v1204 = vsel %vm1203, %v1141, -inf
        %1205 = vmax.xlane.f32.xlu0 %v1204
        %v1206 = vpop.xlane.xlu0 %1205
        %v1207 = vsel %vm1203, %v1144, -inf
        %1208 = vmax.xlane.f32.xlu0 %v1207
        %v1209 = vpop.xlane.xlu0 %1208
        %v1210 = vsel %vm1203, %v1149, -inf
        %1211 = vmax.xlane.f32.xlu0 %v1210
        %v1212 = vpop.xlane.xlu0 %1211
        %v1213 = vsel %vm1203, %v1152, -inf
        %1214 = vmax.xlane.f32.xlu0 %v1213
        %v1215 = vpop.xlane.xlu0 %1214
        %v1216 = vsel %vm1203, %v1157, -inf
        %1217 = vmax.xlane.f32.xlu0 %v1216
        %v1218 = vpop.xlane.xlu0 %1217
        %v1219 = vsel %vm1203, %v1160, -inf
        %1220 = vmax.xlane.f32.xlu0 %v1219
        %v1221 = vpop.xlane.xlu0 %1220
        %v1222 = vsel %vm1203, %v1165, -inf
        %1223 = vmax.xlane.f32.xlu0 %v1222
        %v1224 = vpop.xlane.xlu0 %1223
        %v1225 = vsel %vm1203, %v1168, -inf
        %1226 = vmax.xlane.f32.xlu0 %v1225
        %v1227 = vpop.xlane.xlu0 %1226
        %v1228 = vsel %vm1203, %v1173, -inf
        %1229 = vmax.xlane.f32.xlu0 %v1228
        %v1230 = vpop.xlane.xlu0 %1229
        %v1231 = vsel %vm1203, %v1176, -inf
        %1232 = vmax.xlane.f32.xlu0 %v1231
        %v1233 = vpop.xlane.xlu0 %1232
        %v1234 = vsel %vm1203, %v1181, -inf
        %1235 = vmax.xlane.f32.xlu0 %v1234
        %v1236 = vpop.xlane.xlu0 %1235
        %v1237 = vsel %vm1203, %v1184, -inf
        %1238 = vmax.xlane.f32.xlu0 %v1237
        %v1239 = vpop.xlane.xlu0 %1238
        %v1240 = vsel %vm1203, %v1189, -inf
        %1241 = vmax.xlane.f32.xlu0 %v1240
        %v1242 = vpop.xlane.xlu0 %1241
        %v1243 = vsel %vm1203, %v1192, -inf
        %1244 = vmax.xlane.f32.xlu0 %v1243
        %v1245 = vpop.xlane.xlu0 %1244
        %v1246 = vsel %vm1203, %v1197, -inf
        %1247 = vmax.xlane.f32.xlu0 %v1246
        %v1248 = vpop.xlane.xlu0 %1247
        %v1249 = vsel %vm1203, %v1200, -inf
        %1250 = vmax.xlane.f32.xlu0 %v1249
        %v1251 = vpop.xlane.xlu0 %1250
        %v1252 = vsub.f32 %v1141, %v1206
        %v1253 = vsub.f32 %v1144, %v1209
        %v1254 = vsub.f32 %v1149, %v1212
        %v1255 = vsub.f32 %v1152, %v1215
        %v1256 = vsub.f32 %v1157, %v1218
        %v1257 = vsub.f32 %v1160, %v1221
        %v1258 = vsub.f32 %v1165, %v1224
        %v1259 = vsub.f32 %v1168, %v1227
        %v1260 = vsub.f32 %v1173, %v1230
        %v1261 = vsub.f32 %v1176, %v1233
        %v1262 = vsub.f32 %v1181, %v1236
        %v1263 = vsub.f32 %v1184, %v1239
        %v1264 = vsub.f32 %v1189, %v1242
        %v1265 = vsub.f32 %v1192, %v1245
        %v1266 = vsub.f32 %v1197, %v1248
        %v1267 = vsub.f32 %v1200, %v1251
        %v1268 = vmul.f32 %v1252, 1.442695
        %v1269 = vpow.pop %v1268
        %v1270 = vmul.f32 %v1253, 1.442695
        %v1271 = vpow.pop %v1270
        %v1272 = vmul.f32 %v1254, 1.442695
        %v1273 = vpow.pop %v1272
        %v1274 = vmul.f32 %v1255, 1.442695
        %v1275 = vpow.pop %v1274
        %v1276 = vmul.f32 %v1256, 1.442695
        %v1277 = vpow.pop %v1276
        %v1278 = vmul.f32 %v1257, 1.442695
        %v1279 = vpow.pop %v1278
        %v1280 = vmul.f32 %v1258, 1.442695
        %v1281 = vpow.pop %v1280
        %v1282 = vmul.f32 %v1259, 1.442695
        %v1283 = vpow.pop %v1282
        %v1284 = vmul.f32 %v1260, 1.442695
        %v1285 = vpow.pop %v1284
        %v1286 = vmul.f32 %v1261, 1.442695
        %v1287 = vpow.pop %v1286
        %v1288 = vmul.f32 %v1262, 1.442695
        %v1289 = vpow.pop %v1288
        %v1290 = vmul.f32 %v1263, 1.442695
        %v1291 = vpow.pop %v1290
        %v1292 = vmul.f32 %v1264, 1.442695
        %v1293 = vpow.pop %v1292
        %v1294 = vmul.f32 %v1265, 1.442695
        %v1295 = vpow.pop %v1294
        %v1296 = vmul.f32 %v1266, 1.442695
        %v1297 = vpow.pop %v1296
        %v1298 = vmul.f32 %v1267, 1.442695
        %v1299 = vpow.pop %v1298
        %v1300 = vsel %vm1203, %v1269, 0.0
        %1301 = vadd.xlane.f32.xlu0 %v1300
        %v1302 = vpop.xlane.xlu0 %1301
        %v1303 = vsel %vm1203, %v1271, 0.0
        %1304 = vadd.xlane.f32.xlu0 %v1303
        %v1305 = vpop.xlane.xlu0 %1304
        %v1306 = vsel %vm1203, %v1273, 0.0
        %1307 = vadd.xlane.f32.xlu0 %v1306
        %v1308 = vpop.xlane.xlu0 %1307
        %v1309 = vsel %vm1203, %v1275, 0.0
        %1310 = vadd.xlane.f32.xlu0 %v1309
        %v1311 = vpop.xlane.xlu0 %1310
        %v1312 = vsel %vm1203, %v1277, 0.0
        %1313 = vadd.xlane.f32.xlu0 %v1312
        %v1314 = vpop.xlane.xlu0 %1313
        %v1315 = vsel %vm1203, %v1279, 0.0
        %1316 = vadd.xlane.f32.xlu0 %v1315
        %v1317 = vpop.xlane.xlu0 %1316
        %v1318 = vsel %vm1203, %v1281, 0.0
        %1319 = vadd.xlane.f32.xlu0 %v1318
        %v1320 = vpop.xlane.xlu0 %1319
        %v1321 = vsel %vm1203, %v1283, 0.0
        %1322 = vadd.xlane.f32.xlu0 %v1321
        %v1323 = vpop.xlane.xlu0 %1322
        %v1324 = vsel %vm1203, %v1285, 0.0
        %1325 = vadd.xlane.f32.xlu0 %v1324
        %v1326 = vpop.xlane.xlu0 %1325
        %v1327 = vsel %vm1203, %v1287, 0.0
        %1328 = vadd.xlane.f32.xlu0 %v1327
        %v1329 = vpop.xlane.xlu0 %1328
        %v1330 = vsel %vm1203, %v1289, 0.0
        %1331 = vadd.xlane.f32.xlu0 %v1330
        %v1332 = vpop.xlane.xlu0 %1331
        %v1333 = vsel %vm1203, %v1291, 0.0
        %1334 = vadd.xlane.f32.xlu0 %v1333
        %v1335 = vpop.xlane.xlu0 %1334
        %v1336 = vsel %vm1203, %v1293, 0.0
        %1337 = vadd.xlane.f32.xlu0 %v1336
        %v1338 = vpop.xlane.xlu0 %1337
        %v1339 = vsel %vm1203, %v1295, 0.0
        %1340 = vadd.xlane.f32.xlu0 %v1339
        %v1341 = vpop.xlane.xlu0 %1340
        %v1342 = vsel %vm1203, %v1297, 0.0
        %1343 = vadd.xlane.f32.xlu0 %v1342
        %v1344 = vpop.xlane.xlu0 %1343
        %v1345 = vsel %vm1203, %v1299, 0.0
        %1346 = vadd.xlane.f32.xlu0 %v1345
        %v1347 = vpop.xlane.xlu0 %1346
        %v1348 = vrcp.pop %v1302
        %v1349 = vrcp.pop %v1305
        %v1350 = vrcp.pop %v1308
        %v1351 = vrcp.pop %v1311
        %v1352 = vrcp.pop %v1314
        %v1353 = vrcp.pop %v1317
        %v1354 = vrcp.pop %v1320
        %v1355 = vrcp.pop %v1323
        %v1356 = vrcp.pop %v1326
        %v1357 = vrcp.pop %v1329
        %v1358 = vrcp.pop %v1332
        %v1359 = vrcp.pop %v1335
        %v1360 = vrcp.pop %v1338
        %v1361 = vrcp.pop %v1341
        %v1362 = vrcp.pop %v1344
        %v1363 = vrcp.pop %v1347
        %v1364 = vmul.f32 %v1269, %v1348
        %v1365 = vmul.f32 %v1271, %v1349
        %v1366 = vmul.f32 %v1273, %v1350
        %v1367 = vmul.f32 %v1275, %v1351
        %v1368 = vmul.f32 %v1277, %v1352
        %v1369 = vmul.f32 %v1279, %v1353
        %v1370 = vmul.f32 %v1281, %v1354
        %v1371 = vmul.f32 %v1283, %v1355
        %v1372 = vmul.f32 %v1285, %v1356
        %v1373 = vmul.f32 %v1287, %v1357
        %v1374 = vmul.f32 %v1289, %v1358
        %v1375 = vmul.f32 %v1291, %v1359
        %v1376 = vmul.f32 %v1293, %v1360
        %v1377 = vmul.f32 %v1295, %v1361
        %v1378 = vmul.f32 %v1297, %v1362
        %v1379 = vmul.f32 %v1299, %v1363
        %v1380 = vpack.c.bf16 %v1365, %v1364
        %v1381 = vpack.c.bf16 %v1367, %v1366
        %v1382 = vpack.c.bf16 %v1369, %v1368
        %v1383 = vpack.c.bf16 %v1371, %v1370
        %v1384 = vpack.c.bf16 %v1373, %v1372
        %v1385 = vpack.c.bf16 %v1375, %v1374
        %v1386 = vpack.c.bf16 %v1377, %v1376
        %v1387 = vpack.c.bf16 %v1379, %v1378
        %v1388 = vpack.c.bf16 %v1087, %v1086
        %v1389 = vpack.c.bf16 %v1089, %v1088
        %v1390 = vpack.c.bf16 %v1091, %v1090
        %v1391 = vpack.c.bf16 %v1093, %v1092
        %v1393 = vsel %vm1203, %v1380, 0
        %v1396 = vsel %vm1203, %v1381, 0
        %v1399 = vsel %vm1203, %v1382, 0
        %v1402 = vsel %vm1203, %v1383, 0
        %v1405 = vsel %vm1203, %v1384, 0
        %v1408 = vsel %vm1203, %v1385, 0
        %v1411 = vsel %vm1203, %v1386, 0
        %v1414 = vsel %vm1203, %v1387, 0
        %1416 = vmatprep.subr.bf16.mxu0 0
        %1417 = vmatpush1.bf16.msra.mxu0 0
        %1418 = vmatprep.subr.bf16.mxu0 0
        %1419 = vmatpush1.bf16.msra.mxu0 0
        %1420 = vmatprep.subr.bf16.mxu0 0
        %1421 = vmatpush1.bf16.msra.mxu0 0
        %1422 = vmatprep.subr.bf16.mxu0 0
        %1423 = vmatpush1.bf16.msra.mxu0 0
        %1424 = vmatprep.subr.bf16.mxu0 0
        %1425 = vmatpush1.bf16.msra.mxu0 %v1391
        %1426 = vmatprep.subr.bf16.mxu0 0
        %1427 = vmatpush1.bf16.msra.mxu0 %v1390
        %1428 = vmatprep.subr.bf16.mxu0 0
        %1429 = vmatpush1.bf16.msra.mxu0 %v1389
        %1430 = vmatprep.subr.bf16.mxu0 0
        %1431 = vmatpush1.bf16.msra.mxu0 %v1388
        %1432 = vmatprep.subr.bf16.mxu0 0
        %1433 = vmatpush2.bf16.msra.mxu0 0
        %1434 = vmatprep.subr.bf16.mxu0 0
        %1435 = vmatpush2.bf16.msra.mxu0 0
        %1436 = vmatprep.subr.bf16.mxu0 0
        %1437 = vmatpush2.bf16.msra.mxu0 0
        %1438 = vmatprep.subr.bf16.mxu0 0
        %1439 = vmatpush2.bf16.msra.mxu0 0
        %1440 = vmatprep.subr.bf16.mxu0 0
        %1441 = vmatpush2.bf16.msra.mxu0 0
        %1442 = vmatprep.subr.bf16.mxu0 0
        %1443 = vmatpush2.bf16.msra.mxu0 0
        %1444 = vmatprep.subr.bf16.mxu0 0
        %1445 = vmatpush2.bf16.msra.mxu0 0
        %1446 = vmatprep.subr.bf16.mxu0 0
        %1447 = vmatpush2.bf16.msra.mxu0 0
        %1448 = vmatprep.mubr.bf16.mxu0 0
        %1449 = vmatmul.mubr.bf16.gmra.mxu0 %v1393
        %v1450 = vpop.f32.mrf.mxu0
        %v1451 = vadd.f32 0.0, %v1450
        %v1452 = vpop.f32.mrf.mxu0
        %v1453 = vpop.f32.mrf.mxu0
        %v1454 = vadd.f32 0.0, %v1453
        %v1455 = vpop.f32.mrf.mxu0
        %1456 = vmatprep.mubr.bf16.mxu0 0
        %1457 = vmatmul.mubr.bf16.gmra.mxu0 %v1396
        %v1458 = vpop.f32.mrf.mxu0
        %v1459 = vadd.f32 0.0, %v1458
        %v1460 = vpop.f32.mrf.mxu0
        %v1461 = vpop.f32.mrf.mxu0
        %v1462 = vadd.f32 0.0, %v1461
        %v1463 = vpop.f32.mrf.mxu0
        %1464 = vmatprep.mubr.bf16.mxu0 0
        %1465 = vmatmul.mubr.bf16.gmra.mxu0 %v1399
        %v1466 = vpop.f32.mrf.mxu0
        %v1467 = vadd.f32 0.0, %v1466
        %v1468 = vpop.f32.mrf.mxu0
        %v1469 = vpop.f32.mrf.mxu0
        %v1470 = vadd.f32 0.0, %v1469
        %v1471 = vpop.f32.mrf.mxu0
        %1472 = vmatprep.mubr.bf16.mxu0 0
        %1473 = vmatmul.mubr.bf16.gmra.mxu0 %v1402
        %v1474 = vpop.f32.mrf.mxu0
        %v1475 = vadd.f32 0.0, %v1474
        %v1476 = vpop.f32.mrf.mxu0
        %v1477 = vpop.f32.mrf.mxu0
        %v1478 = vadd.f32 0.0, %v1477
        %v1479 = vpop.f32.mrf.mxu0
        %1480 = vmatprep.mubr.bf16.mxu0 0
        %1481 = vmatmul.mubr.bf16.gmra.mxu0 %v1405
        %v1482 = vpop.f32.mrf.mxu0
        %v1483 = vadd.f32 0.0, %v1482
        %v1484 = vpop.f32.mrf.mxu0
        %v1485 = vpop.f32.mrf.mxu0
        %v1486 = vadd.f32 0.0, %v1485
        %v1487 = vpop.f32.mrf.mxu0
        %1488 = vmatprep.mubr.bf16.mxu0 0
        %1489 = vmatmul.mubr.bf16.gmra.mxu0 %v1408
        %v1490 = vpop.f32.mrf.mxu0
        %v1491 = vadd.f32 0.0, %v1490
        %v1492 = vpop.f32.mrf.mxu0
        %v1493 = vpop.f32.mrf.mxu0
        %v1494 = vadd.f32 0.0, %v1493
        %v1495 = vpop.f32.mrf.mxu0
        %1496 = vmatprep.mubr.bf16.mxu0 0
        %1497 = vmatmul.mubr.bf16.gmra.mxu0 %v1411
        %v1498 = vpop.f32.mrf.mxu0
        %v1499 = vadd.f32 0.0, %v1498
        %v1500 = vpop.f32.mrf.mxu0
        %v1501 = vpop.f32.mrf.mxu0
        %v1502 = vadd.f32 0.0, %v1501
        %v1503 = vpop.f32.mrf.mxu0
        %1504 = vmatprep.mubr.bf16.mxu0 0
        %1505 = vmatmul.mubr.bf16.gmra.mxu0 %v1414
        %v1506 = vpop.f32.mrf.mxu0
        %v1507 = vadd.f32 0.0, %v1506
        %v1508 = vpop.f32.mrf.mxu0
        %v1509 = vpop.f32.mrf.mxu0
        %v1510 = vadd.f32 0.0, %v1509
        %v1511 = vpop.f32.mrf.mxu0
        %1512 = vdwg.mxu0
        %v1513 = vpack.c.bf16 %v1454, %v1451
        %v1514 = vpack.c.bf16 %v1462, %v1459
        %v1515 = vpack.c.bf16 %v1470, %v1467
        %v1516 = vpack.c.bf16 %v1478, %v1475
        %v1517 = vpack.c.bf16 %v1486, %v1483
        %v1518 = vpack.c.bf16 %v1494, %v1491
        %v1519 = vpack.c.bf16 %v1502, %v1499
        %v1520 = vpack.c.bf16 %v1510, %v1507
        %v1521 = vld [vmem:[%s8] sm:$0xf]
        %v1522 = vld [vmem:[%s8 + $0x4] sm:$0xf]
        %v1523 = vld [vmem:[%s8 + $0x8] sm:$0xf]
        %v1524 = vld [vmem:[%s8 + $0xc] sm:$0xf]
        %v1525 = vld [vmem:[%s8 + $0x10] sm:$0xf]
        %v1526 = vld [vmem:[%s8 + $0x14] sm:$0xf]
        %v1527 = vld [vmem:[%s8 + $0x18] sm:$0xf]
        %v1528 = vld [vmem:[%s8 + $0x1c] sm:$0xf]
        %v1529 = vld [vmem:[%s8 + $0x20] sm:$0xf]
        %v1530 = vld [vmem:[%s8 + $0x24] sm:$0xf]
        %v1531 = vld [vmem:[%s8 + $0x28] sm:$0xf]
        %v1532 = vld [vmem:[%s8 + $0x2c] sm:$0xf]
        %v1533 = vld [vmem:[%s8 + $0x30] sm:$0xf]
        %v1534 = vld [vmem:[%s8 + $0x34] sm:$0xf]
        %v1535 = vld [vmem:[%s8 + $0x38] sm:$0xf]
        %v1536 = vld [vmem:[%s8 + $0x3c] sm:$0xf]
        %v1537 = vpack.c.bf16 %v1006, %v1005
        %v1538 = vpack.c.bf16 %v1008, %v1007
        %v1539 = vpack.c.bf16 %v1010, %v1009
        %v1540 = vpack.c.bf16 %v1012, %v1011
        %v1541 = vpack.c.bf16 %v1014, %v1013
        %v1542 = vpack.c.bf16 %v1016, %v1015
        %v1543 = vpack.c.bf16 %v1018, %v1017
        %v1544 = vpack.c.bf16 %v1020, %v1019
        %v1545 = vld [vmem:[%s9] sm:$0xf]
        %v1546 = vld [vmem:[%s9 + $0x4] sm:$0xf]
        %v1547 = vld [vmem:[%s9 + $0x8] sm:$0xf]
        %v1548 = vld [vmem:[%s9 + $0xc] sm:$0xf]
        %v1549 = vld [vmem:[%s9 + $0x10] sm:$0xf]
        %v1550 = vld [vmem:[%s9 + $0x14] sm:$0xf]
        %v1551 = vld [vmem:[%s9 + $0x18] sm:$0xf]
        %v1552 = vld [vmem:[%s9 + $0x1c] sm:$0xf]
        %v1553 = vld [vmem:[%s9 + $0x20] sm:$0xf]
        %v1554 = vld [vmem:[%s9 + $0x24] sm:$0xf]
        %v1555 = vld [vmem:[%s9 + $0x28] sm:$0xf]
        %v1556 = vld [vmem:[%s9 + $0x2c] sm:$0xf]
        %v1557 = vld [vmem:[%s9 + $0x30] sm:$0xf]
        %v1558 = vld [vmem:[%s9 + $0x34] sm:$0xf]
        %v1559 = vld [vmem:[%s9 + $0x38] sm:$0xf]
        %v1560 = vld [vmem:[%s9 + $0x3c] sm:$0xf]
        %v1577 = vunpack.c.l.b16 %v1545
        %v1578 = vunpack.c.l.b16 %v1546
        %v1579 = vunpack.c.l.b16 %v1547
        %v1580 = vunpack.c.l.b16 %v1548
        %v1581 = vunpack.c.l.b16 %v1549
        %v1582 = vunpack.c.l.b16 %v1550
        %v1583 = vunpack.c.l.b16 %v1551
        %v1584 = vunpack.c.l.b16 %v1552
        %v1585 = vunpack.c.l.b16 %v1553
        %v1586 = vunpack.c.l.b16 %v1554
        %v1587 = vunpack.c.l.b16 %v1555
        %v1588 = vunpack.c.l.b16 %v1556
        %v1589 = vunpack.c.l.b16 %v1557
        %v1590 = vunpack.c.l.b16 %v1558
        %v1591 = vunpack.c.l.b16 %v1559
        %v1592 = vunpack.c.l.b16 %v1560
        %v1593 = vpack.c.b16 %v1578, %v1577
        %v1594 = vpack.c.b16 %v1580, %v1579
        %v1595 = vpack.c.b16 %v1582, %v1581
        %v1596 = vpack.c.b16 %v1584, %v1583
        %v1597 = vpack.c.b16 %v1586, %v1585
        %v1598 = vpack.c.b16 %v1588, %v1587
        %v1599 = vpack.c.b16 %v1590, %v1589
        %v1600 = vpack.c.b16 %v1592, %v1591
        %1609 = vmatprep.subr.bf16.mxu0 0
        %1610 = vmatpush1.bf16.msra.mxu0 %v1600
        %1611 = vmatprep.subr.bf16.mxu0 0
        %1612 = vmatpush1.bf16.msra.mxu0 %v1599
        %1613 = vmatprep.subr.bf16.mxu0 0
        %1614 = vmatpush1.bf16.msra.mxu0 %v1598
        %1615 = vmatprep.subr.bf16.mxu0 0
        %1616 = vmatpush1.bf16.msra.mxu0 %v1597
        %1617 = vmatprep.subr.bf16.mxu0 0
        %1618 = vmatpush1.bf16.msra.mxu0 %v1596
        %1619 = vmatprep.subr.bf16.mxu0 0
        %1620 = vmatpush1.bf16.msra.mxu0 %v1595
        %1621 = vmatprep.subr.bf16.mxu0 0
        %1622 = vmatpush1.bf16.msra.mxu0 %v1594
        %1623 = vmatprep.subr.bf16.mxu0 0
        %1624 = vmatpush1.bf16.msra.mxu0 %v1593
        %1625 = vmatprep.subr.bf16.mxu0 0
        %1626 = vmatpush2.bf16.msra.mxu0 0
        %1627 = vmatprep.subr.bf16.mxu0 0
        %1628 = vmatpush2.bf16.msra.mxu0 0
        %1629 = vmatprep.subr.bf16.mxu0 0
        %1630 = vmatpush2.bf16.msra.mxu0 0
        %1631 = vmatprep.subr.bf16.mxu0 0
        %1632 = vmatpush2.bf16.msra.mxu0 0
        %1633 = vmatprep.subr.bf16.mxu0 0
        %1634 = vmatpush2.bf16.msra.mxu0 0
        %1635 = vmatprep.subr.bf16.mxu0 0
        %1636 = vmatpush2.bf16.msra.mxu0 0
        %1637 = vmatprep.subr.bf16.mxu0 0
        %1638 = vmatpush2.bf16.msra.mxu0 0
        %1639 = vmatprep.subr.bf16.mxu0 0
        %1640 = vmatpush2.bf16.msra.mxu0 0
        %1641 = vmatprep.mubr.bf16.mxu0 0
        %1642 = vmatmul.mubr.bf16.gmra.mxu0 %v1537
        %v1643 = vpop.f32.mrf.mxu0
        %v1644 = vadd.f32 0.0, %v1643
        %v1645 = vpop.f32.mrf.mxu0
        %v1646 = vpop.f32.mrf.mxu0
        %v1647 = vadd.f32 0.0, %v1646
        %v1648 = vpop.f32.mrf.mxu0
        %1649 = vmatprep.mubr.bf16.mxu0 0
        %1650 = vmatmul.mubr.bf16.gmra.mxu0 %v1538
        %v1651 = vpop.f32.mrf.mxu0
        %v1652 = vadd.f32 0.0, %v1651
        %v1653 = vpop.f32.mrf.mxu0
        %v1654 = vpop.f32.mrf.mxu0
        %v1655 = vadd.f32 0.0, %v1654
        %v1656 = vpop.f32.mrf.mxu0
        %1657 = vmatprep.mubr.bf16.mxu0 0
        %1658 = vmatmul.mubr.bf16.gmra.mxu0 %v1539
        %v1659 = vpop.f32.mrf.mxu0
        %v1660 = vadd.f32 0.0, %v1659
        %v1661 = vpop.f32.mrf.mxu0
        %v1662 = vpop.f32.mrf.mxu0
        %v1663 = vadd.f32 0.0, %v1662
        %v1664 = vpop.f32.mrf.mxu0
        %1665 = vmatprep.mubr.bf16.mxu0 0
        %1666 = vmatmul.mubr.bf16.gmra.mxu0 %v1540
        %v1667 = vpop.f32.mrf.mxu0
        %v1668 = vadd.f32 0.0, %v1667
        %v1669 = vpop.f32.mrf.mxu0
        %v1670 = vpop.f32.mrf.mxu0
        %v1671 = vadd.f32 0.0, %v1670
        %v1672 = vpop.f32.mrf.mxu0
        %1673 = vmatprep.mubr.bf16.mxu0 0
        %1674 = vmatmul.mubr.bf16.gmra.mxu0 %v1541
        %v1675 = vpop.f32.mrf.mxu0
        %v1676 = vadd.f32 0.0, %v1675
        %v1677 = vpop.f32.mrf.mxu0
        %v1678 = vpop.f32.mrf.mxu0
        %v1679 = vadd.f32 0.0, %v1678
        %v1680 = vpop.f32.mrf.mxu0
        %1681 = vmatprep.mubr.bf16.mxu0 0
        %1682 = vmatmul.mubr.bf16.gmra.mxu0 %v1542
        %v1683 = vpop.f32.mrf.mxu0
        %v1684 = vadd.f32 0.0, %v1683
        %v1685 = vpop.f32.mrf.mxu0
        %v1686 = vpop.f32.mrf.mxu0
        %v1687 = vadd.f32 0.0, %v1686
        %v1688 = vpop.f32.mrf.mxu0
        %1689 = vmatprep.mubr.bf16.mxu0 0
        %1690 = vmatmul.mubr.bf16.gmra.mxu0 %v1543
        %v1691 = vpop.f32.mrf.mxu0
        %v1692 = vadd.f32 0.0, %v1691
        %v1693 = vpop.f32.mrf.mxu0
        %v1694 = vpop.f32.mrf.mxu0
        %v1695 = vadd.f32 0.0, %v1694
        %v1696 = vpop.f32.mrf.mxu0
        %1697 = vmatprep.mubr.bf16.mxu0 0
        %1698 = vmatmul.mubr.bf16.gmra.mxu0 %v1544
        %v1699 = vpop.f32.mrf.mxu0
        %v1700 = vadd.f32 0.0, %v1699
        %v1701 = vpop.f32.mrf.mxu0
        %v1702 = vpop.f32.mrf.mxu0
        %v1703 = vadd.f32 0.0, %v1702
        %v1704 = vpop.f32.mrf.mxu0
        %1705 = vdwg.mxu0
        %v1722 = vunpack.c.l.b16 %v1521
        %v1723 = vunpack.c.l.b16 %v1522
        %v1724 = vunpack.c.l.b16 %v1523
        %v1725 = vunpack.c.l.b16 %v1524
        %v1726 = vunpack.c.l.b16 %v1525
        %v1727 = vunpack.c.l.b16 %v1526
        %v1728 = vunpack.c.l.b16 %v1527
        %v1729 = vunpack.c.l.b16 %v1528
        %v1730 = vunpack.c.l.b16 %v1529
        %v1731 = vunpack.c.l.b16 %v1530
        %v1732 = vunpack.c.l.b16 %v1531
        %v1733 = vunpack.c.l.b16 %v1532
        %v1734 = vunpack.c.l.b16 %v1533
        %v1735 = vunpack.c.l.b16 %v1534
        %v1736 = vunpack.c.l.b16 %v1535
        %v1737 = vunpack.c.l.b16 %v1536
        %v1738 = vpack.c.b16 %v1723, %v1722
        %v1739 = vpack.c.b16 %v1725, %v1724
        %v1740 = vpack.c.b16 %v1727, %v1726
        %v1741 = vpack.c.b16 %v1729, %v1728
        %v1742 = vpack.c.b16 %v1731, %v1730
        %v1743 = vpack.c.b16 %v1733, %v1732
        %v1744 = vpack.c.b16 %v1735, %v1734
        %v1745 = vpack.c.b16 %v1737, %v1736
        %1754 = vmatprep.subr.bf16.mxu0 0
        %1755 = vmatpush1.bf16.msra.mxu0 %v1745
        %1756 = vmatprep.subr.bf16.mxu0 0
        %1757 = vmatpush1.bf16.msra.mxu0 %v1744
        %1758 = vmatprep.subr.bf16.mxu0 0
        %1759 = vmatpush1.bf16.msra.mxu0 %v1743
        %1760 = vmatprep.subr.bf16.mxu0 0
        %1761 = vmatpush1.bf16.msra.mxu0 %v1742
        %1762 = vmatprep.subr.bf16.mxu0 0
        %1763 = vmatpush1.bf16.msra.mxu0 %v1741
        %1764 = vmatprep.subr.bf16.mxu0 0
        %1765 = vmatpush1.bf16.msra.mxu0 %v1740
        %1766 = vmatprep.subr.bf16.mxu0 0
        %1767 = vmatpush1.bf16.msra.mxu0 %v1739
        %1768 = vmatprep.subr.bf16.mxu0 0
        %1769 = vmatpush1.bf16.msra.mxu0 %v1738
        %1770 = vmatprep.subr.bf16.mxu0 0
        %1771 = vmatpush2.bf16.msra.mxu0 0
        %1772 = vmatprep.subr.bf16.mxu0 0
        %1773 = vmatpush2.bf16.msra.mxu0 0
        %1774 = vmatprep.subr.bf16.mxu0 0
        %1775 = vmatpush2.bf16.msra.mxu0 0
        %1776 = vmatprep.subr.bf16.mxu0 0
        %1777 = vmatpush2.bf16.msra.mxu0 0
        %1778 = vmatprep.subr.bf16.mxu0 0
        %1779 = vmatpush2.bf16.msra.mxu0 0
        %1780 = vmatprep.subr.bf16.mxu0 0
        %1781 = vmatpush2.bf16.msra.mxu0 0
        %1782 = vmatprep.subr.bf16.mxu0 0
        %1783 = vmatpush2.bf16.msra.mxu0 0
        %1784 = vmatprep.subr.bf16.mxu0 0
        %1785 = vmatpush2.bf16.msra.mxu0 0
        %1786 = vmatprep.mubr.bf16.mxu0 0
        %1787 = vmatmul.mubr.bf16.gmra.mxu0 %v1513
        %v1788 = vpop.f32.mrf.mxu0
        %v1789 = vadd.f32 %v1644, %v1788
        %v1790 = vpop.f32.mrf.mxu0
        %v1791 = vpop.f32.mrf.mxu0
        %v1792 = vadd.f32 %v1647, %v1791
        %v1793 = vpop.f32.mrf.mxu0
        %1794 = vmatprep.mubr.bf16.mxu0 0
        %1795 = vmatmul.mubr.bf16.gmra.mxu0 %v1514
        %v1796 = vpop.f32.mrf.mxu0
        %v1797 = vadd.f32 %v1652, %v1796
        %v1798 = vpop.f32.mrf.mxu0
        %v1799 = vpop.f32.mrf.mxu0
        %v1800 = vadd.f32 %v1655, %v1799
        %v1801 = vpop.f32.mrf.mxu0
        %1802 = vmatprep.mubr.bf16.mxu0 0
        %1803 = vmatmul.mubr.bf16.gmra.mxu0 %v1515
        %v1804 = vpop.f32.mrf.mxu0
        %v1805 = vadd.f32 %v1660, %v1804
        %v1806 = vpop.f32.mrf.mxu0
        %v1807 = vpop.f32.mrf.mxu0
        %v1808 = vadd.f32 %v1663, %v1807
        %v1809 = vpop.f32.mrf.mxu0
        %1810 = vmatprep.mubr.bf16.mxu0 0
        %1811 = vmatmul.mubr.bf16.gmra.mxu0 %v1516
        %v1812 = vpop.f32.mrf.mxu0
        %v1813 = vadd.f32 %v1668, %v1812
        %v1814 = vpop.f32.mrf.mxu0
        %v1815 = vpop.f32.mrf.mxu0
        %v1816 = vadd.f32 %v1671, %v1815
        %v1817 = vpop.f32.mrf.mxu0
        %1818 = vmatprep.mubr.bf16.mxu0 0
        %1819 = vmatmul.mubr.bf16.gmra.mxu0 %v1517
        %v1820 = vpop.f32.mrf.mxu0
        %v1821 = vadd.f32 %v1676, %v1820
        %v1822 = vpop.f32.mrf.mxu0
        %v1823 = vpop.f32.mrf.mxu0
        %v1824 = vadd.f32 %v1679, %v1823
        %v1825 = vpop.f32.mrf.mxu0
        %1826 = vmatprep.mubr.bf16.mxu0 0
        %1827 = vmatmul.mubr.bf16.gmra.mxu0 %v1518
        %v1828 = vpop.f32.mrf.mxu0
        %v1829 = vadd.f32 %v1684, %v1828
        %v1830 = vpop.f32.mrf.mxu0
        %v1831 = vpop.f32.mrf.mxu0
        %v1832 = vadd.f32 %v1687, %v1831
        %v1833 = vpop.f32.mrf.mxu0
        %1834 = vmatprep.mubr.bf16.mxu0 0
        %1835 = vmatmul.mubr.bf16.gmra.mxu0 %v1519
        %v1836 = vpop.f32.mrf.mxu0
        %v1837 = vadd.f32 %v1692, %v1836
        %v1838 = vpop.f32.mrf.mxu0
        %v1839 = vpop.f32.mrf.mxu0
        %v1840 = vadd.f32 %v1695, %v1839
        %v1841 = vpop.f32.mrf.mxu0
        %1842 = vmatprep.mubr.bf16.mxu0 0
        %1843 = vmatmul.mubr.bf16.gmra.mxu0 %v1520
        %v1844 = vpop.f32.mrf.mxu0
        %v1845 = vadd.f32 %v1700, %v1844
        %v1846 = vpop.f32.mrf.mxu0
        %v1847 = vpop.f32.mrf.mxu0
        %v1848 = vadd.f32 %v1703, %v1847
        %v1849 = vpop.f32.mrf.mxu0
        %1850 = vdwg.mxu0
        %v1851 = vld [vmem:[%s10] sm:$0x1]
        %v1853 = vlaneseq
        %v1854 = vshrl.u32 %v1853, 7
        %v1855 = vsub.s32 0, %v1854
        %v1856 = vrot.slane %v1851, %v1855
        %v1858 = vadd.f32 %v1789, %v1856
        %v1859 = vadd.f32 %v1792, %v1856
        %v1860 = vadd.f32 %v1797, %v1856
        %v1861 = vadd.f32 %v1800, %v1856
        %v1862 = vadd.f32 %v1805, %v1856
        %v1863 = vadd.f32 %v1808, %v1856
        %v1864 = vadd.f32 %v1813, %v1856
        %v1865 = vadd.f32 %v1816, %v1856
        %v1866 = vadd.f32 %v1821, %v1856
        %v1867 = vadd.f32 %v1824, %v1856
        %v1868 = vadd.f32 %v1829, %v1856
        %v1869 = vadd.f32 %v1832, %v1856
        %v1870 = vadd.f32 %v1837, %v1856
        %v1871 = vadd.f32 %v1840, %v1856
        %v1872 = vadd.f32 %v1845, %v1856
        %v1873 = vadd.f32 %v1848, %v1856
        %v1874 = vmax.f32 %v1858, 0.0
        %v1875 = vmax.f32 %v1859, 0.0
        %v1876 = vmax.f32 %v1860, 0.0
        %v1877 = vmax.f32 %v1861, 0.0
        %v1878 = vmax.f32 %v1862, 0.0
        %v1879 = vmax.f32 %v1863, 0.0
        %v1880 = vmax.f32 %v1864, 0.0
        %v1881 = vmax.f32 %v1865, 0.0
        %v1882 = vmax.f32 %v1866, 0.0
        %v1883 = vmax.f32 %v1867, 0.0
        %v1884 = vmax.f32 %v1868, 0.0
        %v1885 = vmax.f32 %v1869, 0.0
        %v1886 = vmax.f32 %v1870, 0.0
        %v1887 = vmax.f32 %v1871, 0.0
        %v1888 = vmax.f32 %v1872, 0.0
        %v1889 = vmax.f32 %v1873, 0.0
        %1890 = vst [vmem:[%s419] sm:$0xff] %v1874
        %1891 = vst [vmem:[%s419 + $0x8] sm:$0xff] %v1875
        %1892 = vst [vmem:[%s419 + $0x10] sm:$0xff] %v1876
        %1893 = vst [vmem:[%s419 + $0x18] sm:$0xff] %v1877
        %1894 = vst [vmem:[%s419 + $0x20] sm:$0xff] %v1878
        %1895 = vst [vmem:[%s419 + $0x28] sm:$0xff] %v1879
        %1896 = vst [vmem:[%s419 + $0x30] sm:$0xff] %v1880
        %1897 = vst [vmem:[%s419 + $0x38] sm:$0xff] %v1881
        %1898 = vst [vmem:[%s419 + $0x40] sm:$0xff] %v1882
        %1899 = vst [vmem:[%s419 + $0x48] sm:$0xff] %v1883
        %1900 = vst [vmem:[%s419 + $0x50] sm:$0xff] %v1884
        %1901 = vst [vmem:[%s419 + $0x58] sm:$0xff] %v1885
        %1902 = vst [vmem:[%s419 + $0x60] sm:$0xff] %v1886
        %1903 = vst [vmem:[%s419 + $0x68] sm:$0xff] %v1887
        %1904 = vst [vmem:[%s419 + $0x70] sm:$0xff] %v1888
        %1905 = vst [vmem:[%s419 + $0x78] sm:$0xff] %v1889
        %s1906 = sand.u32 %s290, 1
        %s1907 = scalar_lea.sflag [#allocation3], %s1906
        %s1908 = sand.u32 %s290, 1
        %s1909 = smul.addr %s1908, 128
        %s1910 = scalar_lea.vmem [#allocation2], %s1909
        // Predicated region
        $region65: #{graph_attention_union.1} parent=63 // pred_check
          %p1911 = pneg %p300
        $region66: #{graph_attention_union.1} parent=63 // pred_check_branch
          %1913 = sbr.rel (%p1911) target = $region68
        $region67: #{graph_attention_union.1} parent=63 // pred_region
          %s1914 = smul.u32 16, %s30
          %s1916 = ssub.s32 2048, 2048
          %1917 = vsyncadd %s1907, %s1916
          %s1918 = smul.addr %s29, 32
          %s1919 = sadd.s32 %s1914, %s1918
          %s1920 = smul.addr %s1919, 128
          %s1921 = scalar_lea.hbm %s11, %s1920
          %s1922 = sshll.u32 %s1910, 4
          %s1923 = int_to_ptr.vmem [resolvable:$true] %s1922
          %1928 = dma.vmem_to_hbm [thread:$0]  %s1923, 2048, %s1921, %s1907, 128, 128, 8
        $region68: #{graph_attention_union.1} parent=63 // pred_fallthru
          _
      $region64: #{graph_attention_union.1} parent=5 // pred_fallthru
        _
      %p1929 = scmp.le.s32.totalorder 2, %s20
      // Predicated region
      $region69: #{graph_attention_union.1} parent=5 // pred_check
        %p1930 = pneg %p1929
      $region70: #{graph_attention_union.1} parent=5 // pred_check_branch
        %1932 = sbr.rel (%p1930) target = $region72
      $region71: #{graph_attention_union.1} parent=5 // pred_region
        %s1933 = ssub.s32 %s20, 2
        // Predicated region
        $region73: #{graph_attention_union.1} parent=71 // pred_check
          %p1934 = pneg %p306
        $region74: #{graph_attention_union.1} parent=71 // pred_check_branch
          %1936 = sbr.rel (%p1934) target = $region76
        $region75: #{graph_attention_union.1} parent=71 // pred_region
          %s1937 = sand.u32 %s291, 1
          %s1938 = scalar_lea.sflag [#allocation3], %s1937
          %s1939 = sand.u32 %s291, 1
          %s1940 = smul.addr %s1939, 128
          %s1941 = scalar_lea.vmem [#allocation2], %s1940
          %1942 = dma.done %s1938, 2048
        $region76: #{graph_attention_union.1} parent=71 // pred_fallthru
          _
      $region72: #{graph_attention_union.1} parent=5 // pred_fallthru
        _
    $region6: #{graph_attention_union.1} parent=1 // loop_footer
      %s24 = sadd.s32 1, %s20
    $region7: #{graph_attention_union.1} parent=1 // loop_footer_branch
      %19 = sbr.rel target = $region3
    $region8: #{graph_attention_union.1} parent=1 // loop_exit
      _
    %1943 = vsyncpa [#allocation3], 1
    %s1944 = scalar_lea.sflag [#allocation3], 1
    %1945 = vsyncpa %s1944, 1

</llo_original>
